<compile_context>
chip_gen: v5e
topology: v5e:2x2
jax: 0.10.0
libtpu: 0.0.40
codegen_flags: <defaults>
</compile_context>

<pallas_src>
import jax
import jax.numpy as jnp
from jax import lax
from jax.experimental import pallas as pl
from jax.experimental.pallas import tpu as pltpu


def _gnn_block_kernel(nn_ref,                    # (B, 1) int32 valid-node counts
                      adj_ref, x_ref,            # (B, N, N), (B, N, Fin)
                      w1_ref, b1_ref,            # GraphConv weight/bias
                      wf1_ref, bf1_ref,          # fc1
                      wf2_ref, bf2_ref,          # fc2
                      wf3_ref, bf3_ref,          # fc3
                      out_ref):                  # (B, OC)
    adj = adj_ref[...]                           # (B, N, N)
    x = x_ref[...]                               # (B, N, Fin)
    B, N, Fin = x.shape
    H1 = w1_ref.shape[1]

    # --- GraphConv with symmetric ('both') normalization ----------------------
    deg = jnp.sum(adj, axis=2, keepdims=True)                         # (B, N, 1)
    norm = jnp.where(deg > 0.0, lax.rsqrt(deg), jnp.zeros_like(deg))  # D^{-1/2}

    # Fold the right norm into x (cheaper: Fin columns instead of H1), then do
    # the feature transform as ONE dense (B*N, Fin) @ (Fin, H1) MXU matmul.
    xn = (x * norm).reshape(B * N, Fin)
    xw = jnp.dot(xn, w1_ref[...],
                 preferred_element_type=jnp.float32).reshape(B, N, H1)

    # Neighborhood aggregation as a single batched matmul over the block.
    agg = jnp.einsum('bij,bjh->bih', adj, xw,
                     preferred_element_type=jnp.float32)              # (B, N, H1)
    h = jnp.maximum(agg * norm + b1_ref[...], 0.0)                    # ReLU

    # --- max-over-valid-nodes readout (one mask build per block) --------------
    # h >= 0 after ReLU, so masking padded nodes with 0 is exact (and safe even
    # for fully padded graphs appended to round G up to a multiple of B).
    n_valid = nn_ref[...].reshape(B, 1, 1)                            # (B, 1, 1)
    node_ids = lax.broadcasted_iota(jnp.int32, (B, N, 1), 1)          # (B, N, 1)
    h_masked = jnp.where(node_ids < n_valid, h, 0.0)
    hg = jnp.max(h_masked, axis=1)                                    # (B, H1)

    # --- MLP head, once per block on the (B, H1) matrix ------------------------
    a = jnp.maximum(
        jnp.dot(hg, wf1_ref[...], preferred_element_type=jnp.float32) + bf1_ref[...],
        0.0)
    a = jnp.maximum(
        jnp.dot(a, wf2_ref[...], preferred_element_type=jnp.float32) + bf2_ref[...],
        0.0)
    a = jnp.dot(a, wf3_ref[...], preferred_element_type=jnp.float32) + bf3_ref[...]

    out_ref[...] = a.astype(out_ref.dtype)                            # (B, OC)


def model_nn1layer_forward(num_nodes, adj, x, params, *, block_graphs=8):
    """num_nodes: (G,) int32; adj: (G,N,N) f32; x: (G,N,Fin) f32."""
    G, N, Fin = x.shape
    w1, b1, wf1, bf1, wf2, bf2, wf3, bf3 = params
    H1 = w1.shape[1]
    L1 = wf1.shape[1]
    L2 = wf2.shape[1]
    OC = wf3.shape[1]

    # Pad the graph axis to a multiple of the per-step block (padded graphs
    # have 0 valid nodes; their rows are sliced off after the call).
    B = block_graphs
    Gp = ((G + B - 1) // B) * B
    if Gp != G:
        pad = Gp - G
        adj = jnp.pad(adj, ((0, pad), (0, 0), (0, 0)))
        x = jnp.pad(x, ((0, pad), (0, 0), (0, 0)))
        num_nodes = jnp.pad(num_nodes, ((0, pad),))
    nn2d = num_nodes.reshape(Gp, 1).astype(jnp.int32)

    full = lambda shape: pl.BlockSpec(shape, lambda g: tuple(0 for _ in shape))

    # Explicit VMEM budget (double-buffered input/output blocks + weights),
    # clamped so the same choice is valid on v7x's 64 MiB VMEM.
    bytes_per = 4
    block_bytes = (B * N * N + B * N * Fin + B + B * OC) * bytes_per
    weight_bytes = (Fin * H1 + H1 + H1 * L1 + L1 + L1 * L2 + L2 + L2 * OC + OC) * bytes_per
    vmem_limit = int(min(48 * 1024 * 1024,
                         max(4 * 1024 * 1024,
                             4 * block_bytes + 2 * weight_bytes + (1 << 20))))

    grid_spec = pltpu.PrefetchScalarGridSpec(
        num_scalar_prefetch=0,
        grid=(Gp // B,),
        in_specs=[
            pl.BlockSpec((B, 1), lambda g: (g, 0)),         # num_nodes per block
            pl.BlockSpec((B, N, N), lambda g: (g, 0, 0)),   # adj
            pl.BlockSpec((B, N, Fin), lambda g: (g, 0, 0)), # x
            full((Fin, H1)), full((1, H1)),                 # GraphConv W, b
            full((H1, L1)), full((1, L1)),                  # fc1
            full((L1, L2)), full((1, L2)),                  # fc2
            full((L2, OC)), full((1, OC)),                  # fc3
        ],
        out_specs=pl.BlockSpec((B, OC), lambda g: (g, 0)),
    )

    out = pl.pallas_call(
        _gnn_block_kernel,
        out_shape=jax.ShapeDtypeStruct((Gp, OC), jnp.float32),
        grid_spec=grid_spec,
        compiler_params=pltpu.CompilerParams(
            dimension_semantics=("parallel",),      # no cross-step accumulator
            vmem_limit_bytes=vmem_limit),
    )(nn2d, adj, x, w1, b1, wf1, bf1, wf2, bf2, wf3, bf3)

    return jnp.squeeze(out[:G])   # matches torch .squeeze() on the concatenated result


def _xavier(key, shape):
    fan_in, fan_out = shape
    bound = (6.0 / (fan_in + fan_out)) ** 0.5
    return jax.random.uniform(key, shape, jnp.float32, -bound, bound)


if __name__ == "__main__":
    # Module-consistent sizes: infeats=8, h1feats=32, fc_layer1=32, fc_layer2=16, outclass=4.
    # 16 graphs, 8 graphs per grid step -> 2 grid steps.
    G, N, Fin, H1, L1, L2, OC = 16, 16, 8, 32, 32, 16, 4
    BLOCK_GRAPHS = 8

    key = jax.random.PRNGKey(0)
    ks = jax.random.split(key, 12)

    # Deterministic parameters (xavier-uniform weights, zero biases; biases 2-D for TPU).
    w1  = _xavier(ks[0], (Fin, H1)); b1  = jnp.zeros((1, H1), jnp.float32)
    wf1 = _xavier(ks[1], (H1, L1));  bf1 = jnp.zeros((1, L1), jnp.float32)
    wf2 = _xavier(ks[2], (L1, L2));  bf2 = jnp.zeros((1, L2), jnp.float32)
    wf3 = _xavier(ks[3], (L2, OC));  bf3 = jnp.zeros((1, OC), jnp.float32)
    params = (w1, b1, wf1, bf1, wf2, bf2, wf3, bf3)

    # Build G padded graphs: random symmetric adjacency + self-loops.
    num_nodes = jnp.array([12, 16, 9, 16, 11, 8, 16, 13,
                           10, 16, 15, 12, 9, 16, 14, 11], dtype=jnp.int32)
    rand_adj = (jax.random.uniform(ks[4], (G, N, N)) > 0.6).astype(jnp.float32)
    rand_adj = jnp.maximum(rand_adj, jnp.transpose(rand_adj, (0, 2, 1)))
    eye = jnp.eye(N, dtype=jnp.float32)[None]
    adj = jnp.maximum(rand_adj, eye)                       # add self-loops (dgl.add_self_loop)
    node_ids = jnp.arange(N)
    valid = (node_ids[None, :] < num_nodes[:, None]).astype(jnp.float32)   # (G, N)
    adj = adj * valid[:, :, None] * valid[:, None, :]      # zero out padded rows/cols
    x = jax.random.normal(ks[5], (G, N, Fin), jnp.float32) * valid[:, :, None]

    out = model_nn1layer_forward(num_nodes, adj, x, params, block_graphs=BLOCK_GRAPHS)
    out = jax.block_until_ready(out)

    # Sanity check against a pure-JAX reference of the same math.
    def ref_one(a, xx, n):
        deg = a.sum(axis=1, keepdims=True)
        nrm = jnp.where(deg > 0, 1.0 / jnp.sqrt(deg), 0.0)
        h = jnp.maximum(nrm * (a @ (nrm * xx @ w1)) + b1, 0.0)
        h = jnp.where(jnp.arange(N)[:, None] < n, h, 0.0)   # relu>=0 -> 0-mask is exact
        hg = h.max(axis=0, keepdims=True)
        a1 = jnp.maximum(hg @ wf1 + bf1, 0.0)
        a2 = jnp.maximum(a1 @ wf2 + bf2, 0.0)
        return (a2 @ wf3 + bf3)[0]

    ref = jnp.stack([ref_one(adj[i], x[i], num_nodes[i]) for i in range(G)])
    assert out.shape == (G, OC), out.shape
    assert jnp.allclose(out, jnp.squeeze(ref), atol=1e-4, rtol=1e-4)

    print("KERNEL_OK")
</pallas_src>

<mosaic_0001>
module attributes {stable_mosaic.version = 11 : i64} {
  func.func @_gnn_block_kernel(%arg0: i32, %arg1: memref<8x1xi32, #tpu.memory_space<vmem>>, %arg2: memref<8x16x16xf32, #tpu.memory_space<vmem>>, %arg3: memref<8x16x8xf32, #tpu.memory_space<vmem>>, %arg4: memref<8x32xf32, #tpu.memory_space<vmem>>, %arg5: memref<1x32xf32, #tpu.memory_space<vmem>>, %arg6: memref<32x32xf32, #tpu.memory_space<vmem>>, %arg7: memref<1x32xf32, #tpu.memory_space<vmem>>, %arg8: memref<32x16xf32, #tpu.memory_space<vmem>>, %arg9: memref<1x16xf32, #tpu.memory_space<vmem>>, %arg10: memref<16x4xf32, #tpu.memory_space<vmem>>, %arg11: memref<1x4xf32, #tpu.memory_space<vmem>>, %arg12: memref<8x4xf32, #tpu.memory_space<vmem>>) attributes {dimension_semantics = [#tpu.dimension_semantics<parallel>], iteration_bounds = array<i64: 2>, scalar_prefetch = 0 : i64, scratch_operands = 0 : i64, tpu.core_type = #tpu.core_type<tc>, window_params = [{transform_indices = @transform_0, window_bounds = array<i64: 8, 1>}, {transform_indices = @transform_1, window_bounds = array<i64: 8, 16, 16>}, {transform_indices = @transform_2, window_bounds = array<i64: 8, 16, 8>}, {pipeline_mode = #tpu.pipeline_mode<synchronous>, transform_indices = @transform_3, window_bounds = array<i64: 8, 32>}, {pipeline_mode = #tpu.pipeline_mode<synchronous>, transform_indices = @transform_4, window_bounds = array<i64: 1, 32>}, {pipeline_mode = #tpu.pipeline_mode<synchronous>, transform_indices = @transform_5, window_bounds = array<i64: 32, 32>}, {pipeline_mode = #tpu.pipeline_mode<synchronous>, transform_indices = @transform_6, window_bounds = array<i64: 1, 32>}, {pipeline_mode = #tpu.pipeline_mode<synchronous>, transform_indices = @transform_7, window_bounds = array<i64: 32, 16>}, {pipeline_mode = #tpu.pipeline_mode<synchronous>, transform_indices = @transform_8, window_bounds = array<i64: 1, 16>}, {pipeline_mode = #tpu.pipeline_mode<synchronous>, transform_indices = @transform_9, window_bounds = array<i64: 16, 4>}, {pipeline_mode = #tpu.pipeline_mode<synchronous>, transform_indices = @transform_10, window_bounds = array<i64: 1, 4>}, {transform_indices = @transform_11, window_bounds = array<i64: 8, 4>}]} {
    %c0 = arith.constant 0 : index
    %c0_0 = arith.constant 0 : index
    %c0_1 = arith.constant 0 : index
    %0 = vector.load %arg2[%c0, %c0_0, %c0_1] : memref<8x16x16xf32, #tpu.memory_space<vmem>>, vector<8x16x16xf32>
    %c0_2 = arith.constant 0 : index
    %c0_3 = arith.constant 0 : index
    %c0_4 = arith.constant 0 : index
    %1 = vector.load %arg3[%c0_2, %c0_3, %c0_4] : memref<8x16x8xf32, #tpu.memory_space<vmem>>, vector<8x16x8xf32>
    %cst = arith.constant dense<0.000000e+00> : vector<8x16xf32>
    %2 = vector.multi_reduction <add>, %0, %cst [2] : vector<8x16x16xf32> to vector<8x16xf32>
    %3 = vector.shape_cast %2 : vector<8x16xf32> to vector<8x16x1xf32>
    %cst_5 = arith.constant 0.000000e+00 : f32
    %4 = vector.broadcast %cst_5 : f32 to vector<8x16x1xf32>
    %5 = arith.cmpf ogt, %3, %4 : vector<8x16x1xf32>
    %6 = math.rsqrt %3 : vector<8x16x1xf32>
    %cst_6 = arith.constant 0.000000e+00 : f32
    %7 = vector.broadcast %cst_6 : f32 to vector<8x16x1xf32>
    %8 = arith.select %5, %6, %7 : vector<8x16x1xi1>, vector<8x16x1xf32>
    %9 = vector.broadcast %8 : vector<8x16x1xf32> to vector<8x16x8xf32>
    %10 = arith.mulf %1, %9 : vector<8x16x8xf32>
    %11 = vector.shape_cast %10 : vector<8x16x8xf32> to vector<128x8xf32>
    %c0_7 = arith.constant 0 : index
    %c0_8 = arith.constant 0 : index
    %12 = vector.load %arg4[%c0_7, %c0_8] : memref<8x32xf32, #tpu.memory_space<vmem>>, vector<8x32xf32>
    %cst_9 = arith.constant dense<0.000000e+00> : vector<128x32xf32>
    %13 = tpu.matmul %11, %12, %cst_9 {dimension_numbers = #tpu.dot_dimension_numbers<[1], [0], [0], [1], [0, 0, 1, 1], [], []>} : vector<128x8xf32>, vector<8x32xf32>, vector<128x32xf32> -> vector<128x32xf32>
    %14 = vector.shape_cast %13 : vector<128x32xf32> to vector<8x16x32xf32>
    "tpu.trace_start"() <{level = 10 : i32, message = "bij,bjh->bih"}> : () -> ()
    %cst_10 = arith.constant dense<0.000000e+00> : vector<8x16x32xf32>
    %15 = tpu.matmul %0, %14, %cst_10 {dimension_numbers = #tpu.dot_dimension_numbers<[2], [1], [1], [2], [0, 0, 0, 1, 1, 2], [0], [0]>} : vector<8x16x16xf32>, vector<8x16x32xf32>, vector<8x16x32xf32> -> vector<8x16x32xf32>
    "tpu.trace_stop"() : () -> ()
    %16 = vector.broadcast %8 : vector<8x16x1xf32> to vector<8x16x32xf32>
    %17 = arith.mulf %15, %16 : vector<8x16x32xf32>
    %c0_11 = arith.constant 0 : index
    %c0_12 = arith.constant 0 : index
    %18 = vector.load %arg5[%c0_11, %c0_12] : memref<1x32xf32, #tpu.memory_space<vmem>>, vector<1x32xf32>
    %19 = vector.shape_cast %18 : vector<1x32xf32> to vector<1x1x32xf32>
    %20 = vector.broadcast %19 : vector<1x1x32xf32> to vector<8x16x32xf32>
    %21 = arith.addf %17, %20 : vector<8x16x32xf32>
    %cst_13 = arith.constant 0.000000e+00 : f32
    %22 = vector.broadcast %cst_13 : f32 to vector<8x16x32xf32>
    %23 = arith.maximumf %21, %22 : vector<8x16x32xf32>
    %c0_14 = arith.constant 0 : index
    %c0_15 = arith.constant 0 : index
    %24 = vector.load %arg1[%c0_14, %c0_15] : memref<8x1xi32, #tpu.memory_space<vmem>>, vector<8x1xi32>
    %25 = vector.shape_cast %24 : vector<8x1xi32> to vector<8x1x1xi32>
    %26 = tpu.iota {dimensions = array<i32: 1>} : vector<8x16x1xi32>
    %27 = vector.broadcast %25 : vector<8x1x1xi32> to vector<8x16x1xi32>
    %28 = arith.cmpi slt, %26, %27 : vector<8x16x1xi32>
    %cst_16 = arith.constant 0.000000e+00 : f32
    %29 = vector.shape_cast %28 : vector<8x16x1xi1> to vector<8x16x1xi1>
    %30 = vector.broadcast %29 : vector<8x16x1xi1> to vector<8x16x32xi1>
    %31 = vector.broadcast %cst_16 : f32 to vector<8x16x32xf32>
    %32 = arith.select %30, %23, %31 : vector<8x16x32xi1>, vector<8x16x32xf32>
    %cst_17 = arith.constant dense<0xFF800000> : vector<8x32xf32>
    %33 = vector.multi_reduction <maximumf>, %32, %cst_17 [1] : vector<8x16x32xf32> to vector<8x32xf32>
    %c0_18 = arith.constant 0 : index
    %c0_19 = arith.constant 0 : index
    %34 = vector.load %arg6[%c0_18, %c0_19] : memref<32x32xf32, #tpu.memory_space<vmem>>, vector<32x32xf32>
    %cst_20 = arith.constant dense<0.000000e+00> : vector<8x32xf32>
    %35 = tpu.matmul %33, %34, %cst_20 {dimension_numbers = #tpu.dot_dimension_numbers<[1], [0], [0], [1], [0, 0, 1, 1], [], []>} : vector<8x32xf32>, vector<32x32xf32>, vector<8x32xf32> -> vector<8x32xf32>
    %c0_21 = arith.constant 0 : index
    %c0_22 = arith.constant 0 : index
    %36 = vector.load %arg7[%c0_21, %c0_22] : memref<1x32xf32, #tpu.memory_space<vmem>>, vector<1x32xf32>
    %37 = vector.broadcast %36 : vector<1x32xf32> to vector<8x32xf32>
    %38 = arith.addf %35, %37 : vector<8x32xf32>
    %cst_23 = arith.constant 0.000000e+00 : f32
    %39 = vector.broadcast %cst_23 : f32 to vector<8x32xf32>
    %40 = arith.maximumf %38, %39 : vector<8x32xf32>
    %c0_24 = arith.constant 0 : index
    %c0_25 = arith.constant 0 : index
    %41 = vector.load %arg8[%c0_24, %c0_25] : memref<32x16xf32, #tpu.memory_space<vmem>>, vector<32x16xf32>
    %cst_26 = arith.constant dense<0.000000e+00> : vector<8x16xf32>
    %42 = tpu.matmul %40, %41, %cst_26 {dimension_numbers = #tpu.dot_dimension_numbers<[1], [0], [0], [1], [0, 0, 1, 1], [], []>} : vector<8x32xf32>, vector<32x16xf32>, vector<8x16xf32> -> vector<8x16xf32>
    %c0_27 = arith.constant 0 : index
    %c0_28 = arith.constant 0 : index
    %43 = vector.load %arg9[%c0_27, %c0_28] : memref<1x16xf32, #tpu.memory_space<vmem>>, vector<1x16xf32>
    %44 = vector.broadcast %43 : vector<1x16xf32> to vector<8x16xf32>
    %45 = arith.addf %42, %44 : vector<8x16xf32>
    %cst_29 = arith.constant 0.000000e+00 : f32
    %46 = vector.broadcast %cst_29 : f32 to vector<8x16xf32>
    %47 = arith.maximumf %45, %46 : vector<8x16xf32>
    %c0_30 = arith.constant 0 : index
    %c0_31 = arith.constant 0 : index
    %48 = vector.load %arg10[%c0_30, %c0_31] : memref<16x4xf32, #tpu.memory_space<vmem>>, vector<16x4xf32>
    %cst_32 = arith.constant dense<0.000000e+00> : vector<8x4xf32>
    %49 = tpu.matmul %47, %48, %cst_32 {dimension_numbers = #tpu.dot_dimension_numbers<[1], [0], [0], [1], [0, 0, 1, 1], [], []>} : vector<8x16xf32>, vector<16x4xf32>, vector<8x4xf32> -> vector<8x4xf32>
    %c0_33 = arith.constant 0 : index
    %c0_34 = arith.constant 0 : index
    %50 = vector.load %arg11[%c0_33, %c0_34] : memref<1x4xf32, #tpu.memory_space<vmem>>, vector<1x4xf32>
    %51 = vector.broadcast %50 : vector<1x4xf32> to vector<8x4xf32>
    %52 = arith.addf %49, %51 : vector<8x4xf32>
    %c0_35 = arith.constant 0 : index
    %c0_36 = arith.constant 0 : index
    %53 = vector.load %arg12[%c0_35, %c0_36] : memref<8x4xf32, #tpu.memory_space<vmem>>, vector<8x4xf32>
    tpu.vector_store %arg12[%c0_35, %c0_36], %52 {strides = array<i32>} : memref<8x4xf32, #tpu.memory_space<vmem>>, vector<8x4xf32>,
    return
  }
  func.func @transform_0(%arg0: i32) -> (i32, i32) {
    %c0_i32 = arith.constant 0 : i32
    %c0_i32_0 = arith.constant 0 : i32
    return %arg0, %c0_i32 : i32, i32
  }
  func.func @transform_1(%arg0: i32) -> (i32, i32, i32) {
    %c0_i32 = arith.constant 0 : i32
    %c0_i32_0 = arith.constant 0 : i32
    %c0_i32_1 = arith.constant 0 : i32
    return %arg0, %c0_i32, %c0_i32_0 : i32, i32, i32
  }
  func.func @transform_2(%arg0: i32) -> (i32, i32, i32) {
    %c0_i32 = arith.constant 0 : i32
    %c0_i32_0 = arith.constant 0 : i32
    %c0_i32_1 = arith.constant 0 : i32
    return %arg0, %c0_i32, %c0_i32_0 : i32, i32, i32
  }
  func.func @transform_3(%arg0: i32) -> (i32, i32) {
    %c0_i32 = arith.constant 0 : i32
    %c0_i32_0 = arith.constant 0 : i32
    %c0_i32_1 = arith.constant 0 : i32
    return %c0_i32, %c0_i32_0 : i32, i32
  }
  func.func @transform_4(%arg0: i32) -> (i32, i32) {
    %c0_i32 = arith.constant 0 : i32
    %c0_i32_0 = arith.constant 0 : i32
    %c0_i32_1 = arith.constant 0 : i32
    return %c0_i32, %c0_i32_0 : i32, i32
  }
  func.func @transform_5(%arg0: i32) -> (i32, i32) {
    %c0_i32 = arith.constant 0 : i32
    %c0_i32_0 = arith.constant 0 : i32
    %c0_i32_1 = arith.constant 0 : i32
    return %c0_i32, %c0_i32_0 : i32, i32
  }
  func.func @transform_6(%arg0: i32) -> (i32, i32) {
    %c0_i32 = arith.constant 0 : i32
    %c0_i32_0 = arith.constant 0 : i32
    %c0_i32_1 = arith.constant 0 : i32
    return %c0_i32, %c0_i32_0 : i32, i32
  }
  func.func @transform_7(%arg0: i32) -> (i32, i32) {
    %c0_i32 = arith.constant 0 : i32
    %c0_i32_0 = arith.constant 0 : i32
    %c0_i32_1 = arith.constant 0 : i32
    return %c0_i32, %c0_i32_0 : i32, i32
  }
  func.func @transform_8(%arg0: i32) -> (i32, i32) {
    %c0_i32 = arith.constant 0 : i32
    %c0_i32_0 = arith.constant 0 : i32
    %c0_i32_1 = arith.constant 0 : i32
    return %c0_i32, %c0_i32_0 : i32, i32
  }
  func.func @transform_9(%arg0: i32) -> (i32, i32) {
    %c0_i32 = arith.constant 0 : i32
    %c0_i32_0 = arith.constant 0 : i32
    %c0_i32_1 = arith.constant 0 : i32
    return %c0_i32, %c0_i32_0 : i32, i32
  }
  func.func @transform_10(%arg0: i32) -> (i32, i32) {
    %c0_i32 = arith.constant 0 : i32
    %c0_i32_0 = arith.constant 0 : i32
    %c0_i32_1 = arith.constant 0 : i32
    return %c0_i32, %c0_i32_0 : i32, i32
  }
  func.func @transform_11(%arg0: i32) -> (i32, i32) {
    %c0_i32 = arith.constant 0 : i32
    %c0_i32_0 = arith.constant 0 : i32
    return %arg0, %c0_i32 : i32, i32
  }
}

</mosaic_0001>

<llo_original>
// kernel: tpu_custom_call.1
$region0: #{tpu_custom_call.1}
  #allocation0 [shape = 'u32[]', space=smem, size = 0x4, offset = 0x4, fixed_abs, tag = 'smem constant byte address 0x4 - core index']
  #allocation1 [shape = 'u32[72,128]{1,0:T(1,128)}', space=vmem, size = 0x9000, scoped, tag = 'internal scratch']
  %s0 = inlined_call_operand.vmem [shape: s32[16,1], index: 0, kind: input, shape index: {}]
  %s1 = inlined_call_operand.vmem [shape: f32[16,16,16], index: 1, kind: input, shape index: {}]
  %s2 = inlined_call_operand.vmem [shape: f32[16,16,8], index: 2, kind: input, shape index: {}]
  %s3 = inlined_call_operand.vmem [shape: f32[8,32], index: 3, kind: input, shape index: {}]
  %s4 = inlined_call_operand.vmem [shape: f32[1,32], index: 4, kind: input, shape index: {}]
  %s5 = inlined_call_operand.vmem [shape: f32[32,32], index: 5, kind: input, shape index: {}]
  %s6 = inlined_call_operand.vmem [shape: f32[1,32], index: 6, kind: input, shape index: {}]
  %s7 = inlined_call_operand.vmem [shape: f32[32,16], index: 7, kind: input, shape index: {}]
  %s8 = inlined_call_operand.vmem [shape: f32[1,16], index: 8, kind: input, shape index: {}]
  %s9 = inlined_call_operand.vmem [shape: f32[16,4], index: 9, kind: input, shape index: {}]
  %s10 = inlined_call_operand.vmem [shape: f32[1,4], index: 10, kind: input, shape index: {}]
  %s11 = inlined_call_operand.vmem [shape: f32[16,4], index: 11, kind: output, shape index: {}]
  %s12 = sld [smem:[#allocation0]]
  $region77: #{tpu_custom_call.1} parent=0
    _
  %s14 = ssub.s32 1, %s12
  %s15 = scalar_select 0, %s14, %s12
  loop: start=0, step=1, limit=4
  $region2: #{tpu_custom_call.1} parent=0 // loop_pre_header
    _
  $region3: #{tpu_custom_call.1} parent=0 // loop_header
    %s17 = sphi 0, %s21
    %p18 = scmp.ge.s32.totalorder %s17, 4
    %s27 = sphi 0, %s29
    %s30 = sphi 0, %s27
    %s31 = sphi 0, %s30
    %s47 = sphi 0, %s31
    %s53 = sphi 0, %s55
    %s56 = sphi 0, %s53
    %s57 = sphi 0, %s56
    %s73 = sphi 0, %s57
    %s79 = sphi 0, %s81
    %s82 = sphi 0, %s79
    %s83 = sphi 0, %s82
    %s99 = sphi 0, %s83
    %s103 = sphi 0, %s103
    %s105 = sphi 0, %s103
    %s106 = sphi 0, %s105
    %s120 = sphi 0, %s106
    %s124 = sphi 0, %s124
    %s126 = sphi 0, %s124
    %s127 = sphi 0, %s126
    %s141 = sphi 0, %s127
    %s145 = sphi 0, %s145
    %s147 = sphi 0, %s145
    %s148 = sphi 0, %s147
    %s162 = sphi 0, %s148
    %s166 = sphi 0, %s166
    %s168 = sphi 0, %s166
    %s169 = sphi 0, %s168
    %s183 = sphi 0, %s169
    %s187 = sphi 0, %s187
    %s189 = sphi 0, %s187
    %s190 = sphi 0, %s189
    %s204 = sphi 0, %s190
    %s208 = sphi 0, %s208
    %s210 = sphi 0, %s208
    %s211 = sphi 0, %s210
    %s225 = sphi 0, %s211
    %s229 = sphi 0, %s229
    %s231 = sphi 0, %s229
    %s232 = sphi 0, %s231
    %s246 = sphi 0, %s232
    %s250 = sphi 0, %s250
    %s252 = sphi 0, %s250
    %s253 = sphi 0, %s252
    %s267 = sphi 0, %s253
    %s273 = sphi 0, %s275
    %s276 = sphi 0, %s273
    %s277 = sphi 0, %s276
    %s293 = sphi 0, %s277
  $region4: #{tpu_custom_call.1} parent=0 // loop_header_branch
    %20 = sbr.rel (%p18) target = $region8
  $region5: #{tpu_custom_call.1} parent=0 // loop_body
    %s22 = ssub.s32 %s17, 1
    %s23 = ssub.s32 %s17, 2
    %s24 = sadd.s32 %s17, 1
    %s25 = ssub.s32 %s17, %s24
    %p26 = scmp.eq.s32.totalorder %s25, 0
    %s28 = sadd.s32 %s27, 1
    %s29 = scalar_select %p26, %s27, %s28
    %p32 = pneg %p26
    %p33 = scmp.eq.s32.totalorder %s17, 1
    %p34 = por %p32, %p33
    %p35 = scmp.ne.s32.totalorder %s27, %s30
    %p36 = scmp.eq.s32.totalorder %s17, 0
    %p37 = por %p35, %p36
    %p38 = scmp.ne.s32.totalorder %s27, %s30
    %p39 = scmp.eq.s32.totalorder %s22, 1
    %p40 = por %p38, %p39
    %p41 = scmp.ne.s32.totalorder %s30, %s31
    %p42 = scmp.eq.s32.totalorder %s22, 0
    %p43 = por %p41, %p42
    %p44 = scmp.ne.s32.totalorder %s30, %s31
    %p45 = scmp.eq.s32.totalorder %s23, 1
    %p46 = por %p44, %p45
    %p48 = scmp.ne.s32.totalorder %s31, %s47
    %p49 = scmp.eq.s32.totalorder %s23, 0
    %p50 = por %p48, %p49
    %s51 = ssub.s32 %s17, %s24
    %p52 = scmp.eq.s32.totalorder %s51, 0
    %s54 = sadd.s32 %s53, 1
    %s55 = scalar_select %p52, %s53, %s54
    %p58 = pneg %p52
    %p59 = scmp.eq.s32.totalorder %s17, 1
    %p60 = por %p58, %p59
    %p61 = scmp.ne.s32.totalorder %s53, %s56
    %p62 = scmp.eq.s32.totalorder %s17, 0
    %p63 = por %p61, %p62
    %p64 = scmp.ne.s32.totalorder %s53, %s56
    %p65 = scmp.eq.s32.totalorder %s22, 1
    %p66 = por %p64, %p65
    %p67 = scmp.ne.s32.totalorder %s56, %s57
    %p68 = scmp.eq.s32.totalorder %s22, 0
    %p69 = por %p67, %p68
    %p70 = scmp.ne.s32.totalorder %s56, %s57
    %p71 = scmp.eq.s32.totalorder %s23, 1
    %p72 = por %p70, %p71
    %p74 = scmp.ne.s32.totalorder %s57, %s73
    %p75 = scmp.eq.s32.totalorder %s23, 0
    %p76 = por %p74, %p75
    %s77 = ssub.s32 %s17, %s24
    %p78 = scmp.eq.s32.totalorder %s77, 0
    %s80 = sadd.s32 %s79, 1
    %s81 = scalar_select %p78, %s79, %s80
    %p84 = pneg %p78
    %p85 = scmp.eq.s32.totalorder %s17, 1
    %p86 = por %p84, %p85
    %p87 = scmp.ne.s32.totalorder %s79, %s82
    %p88 = scmp.eq.s32.totalorder %s17, 0
    %p89 = por %p87, %p88
    %p90 = scmp.ne.s32.totalorder %s79, %s82
    %p91 = scmp.eq.s32.totalorder %s22, 1
    %p92 = por %p90, %p91
    %p93 = scmp.ne.s32.totalorder %s82, %s83
    %p94 = scmp.eq.s32.totalorder %s22, 0
    %p95 = por %p93, %p94
    %p96 = scmp.ne.s32.totalorder %s82, %s83
    %p97 = scmp.eq.s32.totalorder %s23, 1
    %p98 = por %p96, %p97
    %p100 = scmp.ne.s32.totalorder %s83, %s99
    %p101 = scmp.eq.s32.totalorder %s23, 0
    %p102 = por %p100, %p101
    %s104 = sadd.s32 %s103, 1
    %p107 = scmp.eq.s32.totalorder %s17, 1
    %p108 = scmp.ne.s32.totalorder %s103, %s105
    %p109 = scmp.eq.s32.totalorder %s17, 0
    %p110 = por %p108, %p109
    %p111 = scmp.ne.s32.totalorder %s103, %s105
    %p112 = scmp.eq.s32.totalorder %s22, 1
    %p113 = por %p111, %p112
    %p114 = scmp.ne.s32.totalorder %s105, %s106
    %p115 = scmp.eq.s32.totalorder %s22, 0
    %p116 = por %p114, %p115
    %p117 = scmp.ne.s32.totalorder %s105, %s106
    %p118 = scmp.eq.s32.totalorder %s23, 1
    %p119 = por %p117, %p118
    %p121 = scmp.ne.s32.totalorder %s106, %s120
    %p122 = scmp.eq.s32.totalorder %s23, 0
    %p123 = por %p121, %p122
    %s125 = sadd.s32 %s124, 1
    %p128 = scmp.eq.s32.totalorder %s17, 1
    %p129 = scmp.ne.s32.totalorder %s124, %s126
    %p130 = scmp.eq.s32.totalorder %s17, 0
    %p131 = por %p129, %p130
    %p132 = scmp.ne.s32.totalorder %s124, %s126
    %p133 = scmp.eq.s32.totalorder %s22, 1
    %p134 = por %p132, %p133
    %p135 = scmp.ne.s32.totalorder %s126, %s127
    %p136 = scmp.eq.s32.totalorder %s22, 0
    %p137 = por %p135, %p136
    %p138 = scmp.ne.s32.totalorder %s126, %s127
    %p139 = scmp.eq.s32.totalorder %s23, 1
    %p140 = por %p138, %p139
    %p142 = scmp.ne.s32.totalorder %s127, %s141
    %p143 = scmp.eq.s32.totalorder %s23, 0
    %p144 = por %p142, %p143
    %s146 = sadd.s32 %s145, 1
    %p149 = scmp.eq.s32.totalorder %s17, 1
    %p150 = scmp.ne.s32.totalorder %s145, %s147
    %p151 = scmp.eq.s32.totalorder %s17, 0
    %p152 = por %p150, %p151
    %p153 = scmp.ne.s32.totalorder %s145, %s147
    %p154 = scmp.eq.s32.totalorder %s22, 1
    %p155 = por %p153, %p154
    %p156 = scmp.ne.s32.totalorder %s147, %s148
    %p157 = scmp.eq.s32.totalorder %s22, 0
    %p158 = por %p156, %p157
    %p159 = scmp.ne.s32.totalorder %s147, %s148
    %p160 = scmp.eq.s32.totalorder %s23, 1
    %p161 = por %p159, %p160
    %p163 = scmp.ne.s32.totalorder %s148, %s162
    %p164 = scmp.eq.s32.totalorder %s23, 0
    %p165 = por %p163, %p164
    %s167 = sadd.s32 %s166, 1
    %p170 = scmp.eq.s32.totalorder %s17, 1
    %p171 = scmp.ne.s32.totalorder %s166, %s168
    %p172 = scmp.eq.s32.totalorder %s17, 0
    %p173 = por %p171, %p172
    %p174 = scmp.ne.s32.totalorder %s166, %s168
    %p175 = scmp.eq.s32.totalorder %s22, 1
    %p176 = por %p174, %p175
    %p177 = scmp.ne.s32.totalorder %s168, %s169
    %p178 = scmp.eq.s32.totalorder %s22, 0
    %p179 = por %p177, %p178
    %p180 = scmp.ne.s32.totalorder %s168, %s169
    %p181 = scmp.eq.s32.totalorder %s23, 1
    %p182 = por %p180, %p181
    %p184 = scmp.ne.s32.totalorder %s169, %s183
    %p185 = scmp.eq.s32.totalorder %s23, 0
    %p186 = por %p184, %p185
    %s188 = sadd.s32 %s187, 1
    %p191 = scmp.eq.s32.totalorder %s17, 1
    %p192 = scmp.ne.s32.totalorder %s187, %s189
    %p193 = scmp.eq.s32.totalorder %s17, 0
    %p194 = por %p192, %p193
    %p195 = scmp.ne.s32.totalorder %s187, %s189
    %p196 = scmp.eq.s32.totalorder %s22, 1
    %p197 = por %p195, %p196
    %p198 = scmp.ne.s32.totalorder %s189, %s190
    %p199 = scmp.eq.s32.totalorder %s22, 0
    %p200 = por %p198, %p199
    %p201 = scmp.ne.s32.totalorder %s189, %s190
    %p202 = scmp.eq.s32.totalorder %s23, 1
    %p203 = por %p201, %p202
    %p205 = scmp.ne.s32.totalorder %s190, %s204
    %p206 = scmp.eq.s32.totalorder %s23, 0
    %p207 = por %p205, %p206
    %s209 = sadd.s32 %s208, 1
    %p212 = scmp.eq.s32.totalorder %s17, 1
    %p213 = scmp.ne.s32.totalorder %s208, %s210
    %p214 = scmp.eq.s32.totalorder %s17, 0
    %p215 = por %p213, %p214
    %p216 = scmp.ne.s32.totalorder %s208, %s210
    %p217 = scmp.eq.s32.totalorder %s22, 1
    %p218 = por %p216, %p217
    %p219 = scmp.ne.s32.totalorder %s210, %s211
    %p220 = scmp.eq.s32.totalorder %s22, 0
    %p221 = por %p219, %p220
    %p222 = scmp.ne.s32.totalorder %s210, %s211
    %p223 = scmp.eq.s32.totalorder %s23, 1
    %p224 = por %p222, %p223
    %p226 = scmp.ne.s32.totalorder %s211, %s225
    %p227 = scmp.eq.s32.totalorder %s23, 0
    %p228 = por %p226, %p227
    %s230 = sadd.s32 %s229, 1
    %p233 = scmp.eq.s32.totalorder %s17, 1
    %p234 = scmp.ne.s32.totalorder %s229, %s231
    %p235 = scmp.eq.s32.totalorder %s17, 0
    %p236 = por %p234, %p235
    %p237 = scmp.ne.s32.totalorder %s229, %s231
    %p238 = scmp.eq.s32.totalorder %s22, 1
    %p239 = por %p237, %p238
    %p240 = scmp.ne.s32.totalorder %s231, %s232
    %p241 = scmp.eq.s32.totalorder %s22, 0
    %p242 = por %p240, %p241
    %p243 = scmp.ne.s32.totalorder %s231, %s232
    %p244 = scmp.eq.s32.totalorder %s23, 1
    %p245 = por %p243, %p244
    %p247 = scmp.ne.s32.totalorder %s232, %s246
    %p248 = scmp.eq.s32.totalorder %s23, 0
    %p249 = por %p247, %p248
    %s251 = sadd.s32 %s250, 1
    %p254 = scmp.eq.s32.totalorder %s17, 1
    %p255 = scmp.ne.s32.totalorder %s250, %s252
    %p256 = scmp.eq.s32.totalorder %s17, 0
    %p257 = por %p255, %p256
    %p258 = scmp.ne.s32.totalorder %s250, %s252
    %p259 = scmp.eq.s32.totalorder %s22, 1
    %p260 = por %p258, %p259
    %p261 = scmp.ne.s32.totalorder %s252, %s253
    %p262 = scmp.eq.s32.totalorder %s22, 0
    %p263 = por %p261, %p262
    %p264 = scmp.ne.s32.totalorder %s252, %s253
    %p265 = scmp.eq.s32.totalorder %s23, 1
    %p266 = por %p264, %p265
    %p268 = scmp.ne.s32.totalorder %s253, %s267
    %p269 = scmp.eq.s32.totalorder %s23, 0
    %p270 = por %p268, %p269
    %s271 = ssub.s32 %s17, %s24
    %p272 = scmp.eq.s32.totalorder %s271, 0
    %s274 = sadd.s32 %s273, 1
    %s275 = scalar_select %p272, %s273, %s274
    %p278 = pneg %p272
    %p279 = scmp.eq.s32.totalorder %s17, 1
    %p280 = por %p278, %p279
    %p281 = scmp.ne.s32.totalorder %s273, %s276
    %p282 = scmp.eq.s32.totalorder %s17, 0
    %p283 = por %p281, %p282
    %p284 = scmp.ne.s32.totalorder %s273, %s276
    %p285 = scmp.eq.s32.totalorder %s22, 1
    %p286 = por %p284, %p285
    %p287 = scmp.ne.s32.totalorder %s276, %s277
    %p288 = scmp.eq.s32.totalorder %s22, 0
    %p289 = por %p287, %p288
    %p290 = scmp.ne.s32.totalorder %s276, %s277
    %p291 = scmp.eq.s32.totalorder %s23, 1
    %p292 = por %p290, %p291
    %p294 = scmp.ne.s32.totalorder %s277, %s293
    %p295 = scmp.eq.s32.totalorder %s23, 0
    %p296 = por %p294, %p295
    %p297 = scmp.le.s32.totalorder 1, %s17
    %p298 = scmp.lt.s32.totalorder %s17, 3
    %p299 = pnand %p297, %p298
    %p300 = pneg %p299
    // Predicated region
    $region9: #{tpu_custom_call.1} parent=5 // pred_check
      _
    $region10: #{tpu_custom_call.1} parent=5 // pred_check_branch
      %302 = sbr.rel (%p299) target = $region12
    $region11: #{tpu_custom_call.1} parent=5 // pred_region
      %s303 = ssub.s32 %s17, 1
      // Predicated region
      $region13: #{tpu_custom_call.1} parent=11 // pred_check
        %p304 = pneg %p116
      $region14: #{tpu_custom_call.1} parent=11 // pred_check_branch
        %306 = sbr.rel (%p304) target = $region16
      $region15: #{tpu_custom_call.1} parent=11 // pred_region
        _
      $region16: #{tpu_custom_call.1} parent=11 // pred_fallthru
        _
      // Predicated region
      $region17: #{tpu_custom_call.1} parent=11 // pred_check
        %p307 = pneg %p137
      $region18: #{tpu_custom_call.1} parent=11 // pred_check_branch
        %309 = sbr.rel (%p307) target = $region20
      $region19: #{tpu_custom_call.1} parent=11 // pred_region
        _
      $region20: #{tpu_custom_call.1} parent=11 // pred_fallthru
        _
      // Predicated region
      $region21: #{tpu_custom_call.1} parent=11 // pred_check
        %p310 = pneg %p158
      $region22: #{tpu_custom_call.1} parent=11 // pred_check_branch
        %312 = sbr.rel (%p310) target = $region24
      $region23: #{tpu_custom_call.1} parent=11 // pred_region
        _
      $region24: #{tpu_custom_call.1} parent=11 // pred_fallthru
        _
      // Predicated region
      $region25: #{tpu_custom_call.1} parent=11 // pred_check
        %p313 = pneg %p179
      $region26: #{tpu_custom_call.1} parent=11 // pred_check_branch
        %315 = sbr.rel (%p313) target = $region28
      $region27: #{tpu_custom_call.1} parent=11 // pred_region
        _
      $region28: #{tpu_custom_call.1} parent=11 // pred_fallthru
        _
      // Predicated region
      $region29: #{tpu_custom_call.1} parent=11 // pred_check
        %p316 = pneg %p200
      $region30: #{tpu_custom_call.1} parent=11 // pred_check_branch
        %318 = sbr.rel (%p316) target = $region32
      $region31: #{tpu_custom_call.1} parent=11 // pred_region
        _
      $region32: #{tpu_custom_call.1} parent=11 // pred_fallthru
        _
      // Predicated region
      $region33: #{tpu_custom_call.1} parent=11 // pred_check
        %p319 = pneg %p221
      $region34: #{tpu_custom_call.1} parent=11 // pred_check_branch
        %321 = sbr.rel (%p319) target = $region36
      $region35: #{tpu_custom_call.1} parent=11 // pred_region
        _
      $region36: #{tpu_custom_call.1} parent=11 // pred_fallthru
        _
      // Predicated region
      $region37: #{tpu_custom_call.1} parent=11 // pred_check
        %p322 = pneg %p242
      $region38: #{tpu_custom_call.1} parent=11 // pred_check_branch
        %324 = sbr.rel (%p322) target = $region40
      $region39: #{tpu_custom_call.1} parent=11 // pred_region
        _
      $region40: #{tpu_custom_call.1} parent=11 // pred_fallthru
        _
      // Predicated region
      $region41: #{tpu_custom_call.1} parent=11 // pred_check
        %p325 = pneg %p263
      $region42: #{tpu_custom_call.1} parent=11 // pred_check_branch
        %327 = sbr.rel (%p325) target = $region44
      $region43: #{tpu_custom_call.1} parent=11 // pred_region
        _
      $region44: #{tpu_custom_call.1} parent=11 // pred_fallthru
        _
    $region12: #{tpu_custom_call.1} parent=5 // pred_fallthru
      _
    %p328 = scmp.lt.s32.totalorder %s17, 2
    // Predicated region
    $region45: #{tpu_custom_call.1} parent=5 // pred_check
      %p329 = pneg %p328
    $region46: #{tpu_custom_call.1} parent=5 // pred_check_branch
      %331 = sbr.rel (%p329) target = $region48
    $region47: #{tpu_custom_call.1} parent=5 // pred_region
      // Predicated region
      $region49: #{tpu_custom_call.1} parent=47 // pred_check
        %p332 = pneg %p37
      $region50: #{tpu_custom_call.1} parent=47 // pred_check_branch
        %334 = sbr.rel (%p332) target = $region52
      $region51: #{tpu_custom_call.1} parent=47 // pred_region
        %p335 = scmp.lt.s32.totalorder %s17, 1
        %s336 = scalar_select %p335, %s17, 1
        %s337 = smul.addr %s336, 8
        %s338 = scalar_lea.vmem %s0, %s337
      $region52: #{tpu_custom_call.1} parent=47 // pred_fallthru
        _
      // Predicated region
      $region53: #{tpu_custom_call.1} parent=47 // pred_check
        %p339 = pneg %p63
      $region54: #{tpu_custom_call.1} parent=47 // pred_check_branch
        %341 = sbr.rel (%p339) target = $region56
      $region55: #{tpu_custom_call.1} parent=47 // pred_region
        %s342 = smul.u32 8, %s17
        %p343 = scmp.lt.s32.totalorder %s342, 15
        %s344 = scalar_select %p343, %s342, 15
        %s345 = smul.addr %s344, 2
        %s346 = smul.addr %s345, 8
        %s347 = scalar_lea.vmem %s1, %s346
        %s348 = smul.u32 8, %s17
      $region56: #{tpu_custom_call.1} parent=47 // pred_fallthru
        _
      // Predicated region
      $region57: #{tpu_custom_call.1} parent=47 // pred_check
        %p349 = pneg %p89
      $region58: #{tpu_custom_call.1} parent=47 // pred_check_branch
        %351 = sbr.rel (%p349) target = $region60
      $region59: #{tpu_custom_call.1} parent=47 // pred_region
        %s352 = smul.u32 8, %s17
        %p353 = scmp.lt.s32.totalorder %s352, 15
        %s354 = scalar_select %p353, %s352, 15
        %s355 = smul.addr %s354, 2
        %s356 = smul.addr %s355, 8
        %s357 = scalar_lea.vmem %s2, %s356
        %s358 = smul.u32 8, %s17
      $region60: #{tpu_custom_call.1} parent=47 // pred_fallthru
        _
    $region48: #{tpu_custom_call.1} parent=5 // pred_fallthru
      _
    %p359 = scmp.le.s32.totalorder 1, %s17
    %p360 = scmp.lt.s32.totalorder %s17, 3
    %p361 = pnand %p359, %p360
    %p362 = pneg %p361
    // Predicated region
    $region61: #{tpu_custom_call.1} parent=5 // pred_check
      _
    $region62: #{tpu_custom_call.1} parent=5 // pred_check_branch
      %364 = sbr.rel (%p361) target = $region64
    $region63: #{tpu_custom_call.1} parent=5 // pred_region
      %s365 = ssub.s32 %s17, 1
      %p366 = scmp.lt.s32.totalorder %s22, 1
      %s367 = scalar_select %p366, %s22, 1
      %s368 = smul.addr %s367, 8
      %s369 = scalar_lea.vmem %s0, %s368
      %p370 = pneg %p43
      %p371 = pneg %p40
      %s372 = smul.u32 8, %s22
      %p373 = scmp.lt.s32.totalorder %s372, 15
      %s374 = scalar_select %p373, %s372, 15
      %s375 = smul.addr %s374, 2
      %s376 = smul.addr %s375, 8
      %s377 = scalar_lea.vmem %s1, %s376
      %p378 = pneg %p69
      %p379 = pneg %p66
      %s380 = smul.u32 8, %s22
      %p381 = scmp.lt.s32.totalorder %s380, 15
      %s382 = scalar_select %p381, %s380, 15
      %s383 = smul.addr %s382, 2
      %s384 = smul.addr %s383, 8
      %s385 = scalar_lea.vmem %s2, %s384
      %p386 = pneg %p95
      %p387 = pneg %p92
      %p388 = pneg %p116
      %p389 = pneg %p113
      %p390 = pneg %p137
      %p391 = pneg %p134
      %p392 = pneg %p158
      %p393 = pneg %p155
      %p394 = pneg %p179
      %p395 = pneg %p176
      %p396 = pneg %p200
      %p397 = pneg %p197
      %p398 = pneg %p221
      %p399 = pneg %p218
      %p400 = pneg %p242
      %p401 = pneg %p239
      %p402 = pneg %p263
      %p403 = pneg %p260
      %p404 = pneg %p289
      %p405 = pneg %p286
      %p406 = scmp.lt.s32.totalorder %s22, 1
      %s407 = scalar_select %p406, %s22, 1
      %s408 = smul.addr %s407, 8
      %s409 = scalar_lea.vmem %s11, %s408
      %p410 = scmp.lt.s32.totalorder %s22, 1
      %s411 = scalar_select %p410, %s22, 1
      %s412 = smul.addr %s411, 8
      %s413 = scalar_lea.vmem %s0, %s412
      %s414 = smul.u32 8, %s22
      %p415 = scmp.lt.s32.totalorder %s414, 15
      %s416 = scalar_select %p415, %s414, 15
      %s417 = smul.addr %s416, 2
      %s418 = smul.addr %s417, 8
      %s419 = scalar_lea.vmem %s1, %s418
      %s420 = smul.u32 8, %s22
      %s421 = smul.u32 8, %s22
      %p422 = scmp.lt.s32.totalorder %s421, 15
      %s423 = scalar_select %p422, %s421, 15
      %s424 = smul.addr %s423, 2
      %s425 = smul.addr %s424, 8
      %s426 = scalar_lea.vmem %s2, %s425
      %s427 = smul.u32 8, %s22
      %p428 = scmp.lt.s32.totalorder %s22, 1
      %s429 = scalar_select %p428, %s22, 1
      %s430 = smul.addr %s429, 8
      %s431 = scalar_lea.vmem %s11, %s430
      %v432 = vld [vmem:[%s419] sm:$0xff]
      %v433 = vld [vmem:[%s419 + $0x8] sm:$0xff]
      %v434 = vld [vmem:[%s419 + $0x10] sm:$0xff]
      %v435 = vld [vmem:[%s419 + $0x18] sm:$0xff]
      %v436 = vld [vmem:[%s419 + $0x20] sm:$0xff]
      %v437 = vld [vmem:[%s419 + $0x28] sm:$0xff]
      %v438 = vld [vmem:[%s419 + $0x30] sm:$0xff]
      %v439 = vld [vmem:[%s419 + $0x38] sm:$0xff]
      %v440 = vld [vmem:[%s419 + $0x40] sm:$0xff]
      %v441 = vld [vmem:[%s419 + $0x48] sm:$0xff]
      %v442 = vld [vmem:[%s419 + $0x50] sm:$0xff]
      %v443 = vld [vmem:[%s419 + $0x58] sm:$0xff]
      %v444 = vld [vmem:[%s419 + $0x60] sm:$0xff]
      %v445 = vld [vmem:[%s419 + $0x68] sm:$0xff]
      %v446 = vld [vmem:[%s419 + $0x70] sm:$0xff]
      %v447 = vld [vmem:[%s419 + $0x78] sm:$0xff]
      %v448 = vld [vmem:[%s426] sm:$0xff]
      %v449 = vld [vmem:[%s426 + $0x8] sm:$0xff]
      %v450 = vld [vmem:[%s426 + $0x10] sm:$0xff]
      %v451 = vld [vmem:[%s426 + $0x18] sm:$0xff]
      %v452 = vld [vmem:[%s426 + $0x20] sm:$0xff]
      %v453 = vld [vmem:[%s426 + $0x28] sm:$0xff]
      %v454 = vld [vmem:[%s426 + $0x30] sm:$0xff]
      %v455 = vld [vmem:[%s426 + $0x38] sm:$0xff]
      %v456 = vld [vmem:[%s426 + $0x40] sm:$0xff]
      %v457 = vld [vmem:[%s426 + $0x48] sm:$0xff]
      %v458 = vld [vmem:[%s426 + $0x50] sm:$0xff]
      %v459 = vld [vmem:[%s426 + $0x58] sm:$0xff]
      %v460 = vld [vmem:[%s426 + $0x60] sm:$0xff]
      %v461 = vld [vmem:[%s426 + $0x68] sm:$0xff]
      %v462 = vld [vmem:[%s426 + $0x70] sm:$0xff]
      %v463 = vld [vmem:[%s426 + $0x78] sm:$0xff]
      %vm464 = vcmask 130048
      %v465 = vsel %vm464, %v432, 0.0
      %466 = vadd.xlane.f32.xlu0 %v465
      %v467 = vpop.xlane.xlu0 %466
      %v468 = vsel %vm464, %v433, 0.0
      %469 = vadd.xlane.f32.xlu0 %v468
      %v470 = vpop.xlane.xlu0 %469
      %v471 = vsel %vm464, %v434, 0.0
      %472 = vadd.xlane.f32.xlu0 %v471
      %v473 = vpop.xlane.xlu0 %472
      %v474 = vsel %vm464, %v435, 0.0
      %475 = vadd.xlane.f32.xlu0 %v474
      %v476 = vpop.xlane.xlu0 %475
      %v477 = vsel %vm464, %v436, 0.0
      %478 = vadd.xlane.f32.xlu0 %v477
      %v479 = vpop.xlane.xlu0 %478
      %v480 = vsel %vm464, %v437, 0.0
      %481 = vadd.xlane.f32.xlu0 %v480
      %v482 = vpop.xlane.xlu0 %481
      %v483 = vsel %vm464, %v438, 0.0
      %484 = vadd.xlane.f32.xlu0 %v483
      %v485 = vpop.xlane.xlu0 %484
      %v486 = vsel %vm464, %v439, 0.0
      %487 = vadd.xlane.f32.xlu0 %v486
      %v488 = vpop.xlane.xlu0 %487
      %v489 = vsel %vm464, %v440, 0.0
      %490 = vadd.xlane.f32.xlu0 %v489
      %v491 = vpop.xlane.xlu0 %490
      %v492 = vsel %vm464, %v441, 0.0
      %493 = vadd.xlane.f32.xlu0 %v492
      %v494 = vpop.xlane.xlu0 %493
      %v495 = vsel %vm464, %v442, 0.0
      %496 = vadd.xlane.f32.xlu0 %v495
      %v497 = vpop.xlane.xlu0 %496
      %v498 = vsel %vm464, %v443, 0.0
      %499 = vadd.xlane.f32.xlu0 %v498
      %v500 = vpop.xlane.xlu0 %499
      %v501 = vsel %vm464, %v444, 0.0
      %502 = vadd.xlane.f32.xlu0 %v501
      %v503 = vpop.xlane.xlu0 %502
      %v504 = vsel %vm464, %v445, 0.0
      %505 = vadd.xlane.f32.xlu0 %v504
      %v506 = vpop.xlane.xlu0 %505
      %v507 = vsel %vm464, %v446, 0.0
      %508 = vadd.xlane.f32.xlu0 %v507
      %v509 = vpop.xlane.xlu0 %508
      %v510 = vsel %vm464, %v447, 0.0
      %511 = vadd.xlane.f32.xlu0 %v510
      %v512 = vpop.xlane.xlu0 %511
      %vm513 = vcmp.gt.f32.partialorder %v467, 0.0
      %vm514 = vcmp.gt.f32.partialorder %v470, 0.0
      %vm515 = vcmp.gt.f32.partialorder %v473, 0.0
      %vm516 = vcmp.gt.f32.partialorder %v476, 0.0
      %vm517 = vcmp.gt.f32.partialorder %v479, 0.0
      %vm518 = vcmp.gt.f32.partialorder %v482, 0.0
      %vm519 = vcmp.gt.f32.partialorder %v485, 0.0
      %vm520 = vcmp.gt.f32.partialorder %v488, 0.0
      %vm521 = vcmp.gt.f32.partialorder %v491, 0.0
      %vm522 = vcmp.gt.f32.partialorder %v494, 0.0
      %vm523 = vcmp.gt.f32.partialorder %v497, 0.0
      %vm524 = vcmp.gt.f32.partialorder %v500, 0.0
      %vm525 = vcmp.gt.f32.partialorder %v503, 0.0
      %vm526 = vcmp.gt.f32.partialorder %v506, 0.0
      %vm527 = vcmp.gt.f32.partialorder %v509, 0.0
      %vm528 = vcmp.gt.f32.partialorder %v512, 0.0
      %v529 = vrsqrt.pop %v467
      %v530 = vmul.f32 %v529, %v467
      %v531 = vmul.f32 %v530, %v529
      %v532 = vmul.f32 0.5, %v531
      %v533 = vsub.f32 1.5, %v532
      %v534 = vmul.f32 %v529, %v533
      %vm535 = vweird.f32 %v467
      %vm536 = vweird.f32 %v529
      %vm537 = vmor %vm535, %vm536
      %v538 = vsel %vm537, %v529, %v534
      %v539 = vrsqrt.pop %v470
      %v540 = vmul.f32 %v539, %v470
      %v541 = vmul.f32 %v540, %v539
      %v542 = vmul.f32 0.5, %v541
      %v543 = vsub.f32 1.5, %v542
      %v544 = vmul.f32 %v539, %v543
      %vm545 = vweird.f32 %v470
      %vm546 = vweird.f32 %v539
      %vm547 = vmor %vm545, %vm546
      %v548 = vsel %vm547, %v539, %v544
      %v549 = vrsqrt.pop %v473
      %v550 = vmul.f32 %v549, %v473
      %v551 = vmul.f32 %v550, %v549
      %v552 = vmul.f32 0.5, %v551
      %v553 = vsub.f32 1.5, %v552
      %v554 = vmul.f32 %v549, %v553
      %vm555 = vweird.f32 %v473
      %vm556 = vweird.f32 %v549
      %vm557 = vmor %vm555, %vm556
      %v558 = vsel %vm557, %v549, %v554
      %v559 = vrsqrt.pop %v476
      %v560 = vmul.f32 %v559, %v476
      %v561 = vmul.f32 %v560, %v559
      %v562 = vmul.f32 0.5, %v561
      %v563 = vsub.f32 1.5, %v562
      %v564 = vmul.f32 %v559, %v563
      %vm565 = vweird.f32 %v476
      %vm566 = vweird.f32 %v559
      %vm567 = vmor %vm565, %vm566
      %v568 = vsel %vm567, %v559, %v564
      %v569 = vrsqrt.pop %v479
      %v570 = vmul.f32 %v569, %v479
      %v571 = vmul.f32 %v570, %v569
      %v572 = vmul.f32 0.5, %v571
      %v573 = vsub.f32 1.5, %v572
      %v574 = vmul.f32 %v569, %v573
      %vm575 = vweird.f32 %v479
      %vm576 = vweird.f32 %v569
      %vm577 = vmor %vm575, %vm576
      %v578 = vsel %vm577, %v569, %v574
      %v579 = vrsqrt.pop %v482
      %v580 = vmul.f32 %v579, %v482
      %v581 = vmul.f32 %v580, %v579
      %v582 = vmul.f32 0.5, %v581
      %v583 = vsub.f32 1.5, %v582
      %v584 = vmul.f32 %v579, %v583
      %vm585 = vweird.f32 %v482
      %vm586 = vweird.f32 %v579
      %vm587 = vmor %vm585, %vm586
      %v588 = vsel %vm587, %v579, %v584
      %v589 = vrsqrt.pop %v485
      %v590 = vmul.f32 %v589, %v485
      %v591 = vmul.f32 %v590, %v589
      %v592 = vmul.f32 0.5, %v591
      %v593 = vsub.f32 1.5, %v592
      %v594 = vmul.f32 %v589, %v593
      %vm595 = vweird.f32 %v485
      %vm596 = vweird.f32 %v589
      %vm597 = vmor %vm595, %vm596
      %v598 = vsel %vm597, %v589, %v594
      %v599 = vrsqrt.pop %v488
      %v600 = vmul.f32 %v599, %v488
      %v601 = vmul.f32 %v600, %v599
      %v602 = vmul.f32 0.5, %v601
      %v603 = vsub.f32 1.5, %v602
      %v604 = vmul.f32 %v599, %v603
      %vm605 = vweird.f32 %v488
      %vm606 = vweird.f32 %v599
      %vm607 = vmor %vm605, %vm606
      %v608 = vsel %vm607, %v599, %v604
      %v609 = vrsqrt.pop %v491
      %v610 = vmul.f32 %v609, %v491
      %v611 = vmul.f32 %v610, %v609
      %v612 = vmul.f32 0.5, %v611
      %v613 = vsub.f32 1.5, %v612
      %v614 = vmul.f32 %v609, %v613
      %vm615 = vweird.f32 %v491
      %vm616 = vweird.f32 %v609
      %vm617 = vmor %vm615, %vm616
      %v618 = vsel %vm617, %v609, %v614
      %v619 = vrsqrt.pop %v494
      %v620 = vmul.f32 %v619, %v494
      %v621 = vmul.f32 %v620, %v619
      %v622 = vmul.f32 0.5, %v621
      %v623 = vsub.f32 1.5, %v622
      %v624 = vmul.f32 %v619, %v623
      %vm625 = vweird.f32 %v494
      %vm626 = vweird.f32 %v619
      %vm627 = vmor %vm625, %vm626
      %v628 = vsel %vm627, %v619, %v624
      %v629 = vrsqrt.pop %v497
      %v630 = vmul.f32 %v629, %v497
      %v631 = vmul.f32 %v630, %v629
      %v632 = vmul.f32 0.5, %v631
      %v633 = vsub.f32 1.5, %v632
      %v634 = vmul.f32 %v629, %v633
      %vm635 = vweird.f32 %v497
      %vm636 = vweird.f32 %v629
      %vm637 = vmor %vm635, %vm636
      %v638 = vsel %vm637, %v629, %v634
      %v639 = vrsqrt.pop %v500
      %v640 = vmul.f32 %v639, %v500
      %v641 = vmul.f32 %v640, %v639
      %v642 = vmul.f32 0.5, %v641
      %v643 = vsub.f32 1.5, %v642
      %v644 = vmul.f32 %v639, %v643
      %vm645 = vweird.f32 %v500
      %vm646 = vweird.f32 %v639
      %vm647 = vmor %vm645, %vm646
      %v648 = vsel %vm647, %v639, %v644
      %v649 = vrsqrt.pop %v503
      %v650 = vmul.f32 %v649, %v503
      %v651 = vmul.f32 %v650, %v649
      %v652 = vmul.f32 0.5, %v651
      %v653 = vsub.f32 1.5, %v652
      %v654 = vmul.f32 %v649, %v653
      %vm655 = vweird.f32 %v503
      %vm656 = vweird.f32 %v649
      %vm657 = vmor %vm655, %vm656
      %v658 = vsel %vm657, %v649, %v654
      %v659 = vrsqrt.pop %v506
      %v660 = vmul.f32 %v659, %v506
      %v661 = vmul.f32 %v660, %v659
      %v662 = vmul.f32 0.5, %v661
      %v663 = vsub.f32 1.5, %v662
      %v664 = vmul.f32 %v659, %v663
      %vm665 = vweird.f32 %v506
      %vm666 = vweird.f32 %v659
      %vm667 = vmor %vm665, %vm666
      %v668 = vsel %vm667, %v659, %v664
      %v669 = vrsqrt.pop %v509
      %v670 = vmul.f32 %v669, %v509
      %v671 = vmul.f32 %v670, %v669
      %v672 = vmul.f32 0.5, %v671
      %v673 = vsub.f32 1.5, %v672
      %v674 = vmul.f32 %v669, %v673
      %vm675 = vweird.f32 %v509
      %vm676 = vweird.f32 %v669
      %vm677 = vmor %vm675, %vm676
      %v678 = vsel %vm677, %v669, %v674
      %v679 = vrsqrt.pop %v512
      %v680 = vmul.f32 %v679, %v512
      %v681 = vmul.f32 %v680, %v679
      %v682 = vmul.f32 0.5, %v681
      %v683 = vsub.f32 1.5, %v682
      %v684 = vmul.f32 %v679, %v683
      %vm685 = vweird.f32 %v512
      %vm686 = vweird.f32 %v679
      %vm687 = vmor %vm685, %vm686
      %v688 = vsel %vm687, %v679, %v684
      %v689 = vsel %vm513, %v538, 0.0
      %v690 = vsel %vm514, %v548, 0.0
      %v691 = vsel %vm515, %v558, 0.0
      %v692 = vsel %vm516, %v568, 0.0
      %v693 = vsel %vm517, %v578, 0.0
      %v694 = vsel %vm518, %v588, 0.0
      %v695 = vsel %vm519, %v598, 0.0
      %v696 = vsel %vm520, %v608, 0.0
      %v697 = vsel %vm521, %v618, 0.0
      %v698 = vsel %vm522, %v628, 0.0
      %v699 = vsel %vm523, %v638, 0.0
      %v700 = vsel %vm524, %v648, 0.0
      %v701 = vsel %vm525, %v658, 0.0
      %v702 = vsel %vm526, %v668, 0.0
      %v703 = vsel %vm527, %v678, 0.0
      %v704 = vsel %vm528, %v688, 0.0
      %v705 = vmul.f32 %v448, %v689
      %v706 = vmul.f32 %v449, %v690
      %v707 = vmul.f32 %v450, %v691
      %v708 = vmul.f32 %v451, %v692
      %v709 = vmul.f32 %v452, %v693
      %v710 = vmul.f32 %v453, %v694
      %v711 = vmul.f32 %v454, %v695
      %v712 = vmul.f32 %v455, %v696
      %v713 = vmul.f32 %v456, %v697
      %v714 = vmul.f32 %v457, %v698
      %v715 = vmul.f32 %v458, %v699
      %v716 = vmul.f32 %v459, %v700
      %v717 = vmul.f32 %v460, %v701
      %v718 = vmul.f32 %v461, %v702
      %v719 = vmul.f32 %v462, %v703
      %v720 = vmul.f32 %v463, %v704
      %v721 = vld [vmem:[%s3] sm:$0xff]
      %vm722 = vcmask 64512
      %v724 = vsel %vm722, %v705, 0
      %v727 = vsel %vm722, %v706, 0
      %v730 = vsel %vm722, %v707, 0
      %v733 = vsel %vm722, %v708, 0
      %v736 = vsel %vm722, %v709, 0
      %v739 = vsel %vm722, %v710, 0
      %v742 = vsel %vm722, %v711, 0
      %v745 = vsel %vm722, %v712, 0
      %v748 = vsel %vm722, %v713, 0
      %v751 = vsel %vm722, %v714, 0
      %v754 = vsel %vm722, %v715, 0
      %v757 = vsel %vm722, %v716, 0
      %v760 = vsel %vm722, %v717, 0
      %v763 = vsel %vm722, %v718, 0
      %v766 = vsel %vm722, %v719, 0
      %v769 = vsel %vm722, %v720, 0
      %771 = vmatpush.msra.mxu0 0.0
      %772 = vmatpush.msra.mxu0 0.0
      %773 = vmatpush.msra.mxu0 0.0
      %774 = vmatpush.msra.mxu0 0.0
      %775 = vmatpush.msra.mxu0 0.0
      %776 = vmatpush.msra.mxu0 0.0
      %777 = vmatpush.msra.mxu0 0.0
      %778 = vmatpush.msra.mxu0 0.0
      %779 = vmatpush.msra.mxu0 0.0
      %780 = vmatpush.msra.mxu0 0.0
      %781 = vmatpush.msra.mxu0 0.0
      %782 = vmatpush.msra.mxu0 0.0
      %783 = vmatpush.msra.mxu0 0.0
      %784 = vmatpush.msra.mxu0 0.0
      %785 = vmatpush.msra.mxu0 0.0
      %786 = vmatpush.msra.mxu0 %v721
      %787 = vmatmul.f32.gmra.mxu0 %v724
      %v788 = vpop.f32.mrf.mxu0
      %v789 = vadd.f32 0.0, %v788
      %790 = vmatmul.f32.gmra.mxu0 %v727
      %v791 = vpop.f32.mrf.mxu0
      %v792 = vadd.f32 0.0, %v791
      %793 = vmatmul.f32.gmra.mxu0 %v730
      %v794 = vpop.f32.mrf.mxu0
      %v795 = vadd.f32 0.0, %v794
      %796 = vmatmul.f32.gmra.mxu0 %v733
      %v797 = vpop.f32.mrf.mxu0
      %v798 = vadd.f32 0.0, %v797
      %799 = vmatmul.f32.gmra.mxu0 %v736
      %v800 = vpop.f32.mrf.mxu0
      %v801 = vadd.f32 0.0, %v800
      %802 = vmatmul.f32.gmra.mxu0 %v739
      %v803 = vpop.f32.mrf.mxu0
      %v804 = vadd.f32 0.0, %v803
      %805 = vmatmul.f32.gmra.mxu0 %v742
      %v806 = vpop.f32.mrf.mxu0
      %v807 = vadd.f32 0.0, %v806
      %808 = vmatmul.f32.gmra.mxu0 %v745
      %v809 = vpop.f32.mrf.mxu0
      %v810 = vadd.f32 0.0, %v809
      %811 = vmatmul.f32.gmra.mxu0 %v748
      %v812 = vpop.f32.mrf.mxu0
      %v813 = vadd.f32 0.0, %v812
      %814 = vmatmul.f32.gmra.mxu0 %v751
      %v815 = vpop.f32.mrf.mxu0
      %v816 = vadd.f32 0.0, %v815
      %817 = vmatmul.f32.gmra.mxu0 %v754
      %v818 = vpop.f32.mrf.mxu0
      %v819 = vadd.f32 0.0, %v818
      %820 = vmatmul.f32.gmra.mxu0 %v757
      %v821 = vpop.f32.mrf.mxu0
      %v822 = vadd.f32 0.0, %v821
      %823 = vmatmul.f32.gmra.mxu0 %v760
      %v824 = vpop.f32.mrf.mxu0
      %v825 = vadd.f32 0.0, %v824
      %826 = vmatmul.f32.gmra.mxu0 %v763
      %v827 = vpop.f32.mrf.mxu0
      %v828 = vadd.f32 0.0, %v827
      %829 = vmatmul.f32.gmra.mxu0 %v766
      %v830 = vpop.f32.mrf.mxu0
      %v831 = vadd.f32 0.0, %v830
      %832 = vmatmul.f32.gmra.mxu0 %v769
      %v833 = vpop.f32.mrf.mxu0
      %v834 = vadd.f32 0.0, %v833
      %835 = vdwg.mxu0
      %v837 = vsel %vm464, %v432, 0
      %v840 = vsel %vm464, %v433, 0
      %842 = vmatpush.msra.mxu0 0.0
      %843 = vmatpush.msra.mxu0 0.0
      %844 = vmatpush.msra.mxu0 0.0
      %845 = vmatpush.msra.mxu0 0.0
      %846 = vmatpush.msra.mxu0 0.0
      %847 = vmatpush.msra.mxu0 0.0
      %848 = vmatpush.msra.mxu0 0.0
      %849 = vmatpush.msra.mxu0 0.0
      %850 = vmatpush.msra.mxu0 0.0
      %851 = vmatpush.msra.mxu0 0.0
      %852 = vmatpush.msra.mxu0 0.0
      %853 = vmatpush.msra.mxu0 0.0
      %854 = vmatpush.msra.mxu0 0.0
      %855 = vmatpush.msra.mxu0 0.0
      %856 = vmatpush.msra.mxu0 %v792
      %857 = vmatpush.msra.mxu0 %v789
      %858 = vmatmul.f32.gmra.mxu0 %v837
      %v859 = vpop.f32.mrf.mxu0
      %v860 = vadd.f32 0.0, %v859
      %861 = vmatmul.f32.gmra.mxu0 %v840
      %v862 = vpop.f32.mrf.mxu0
      %v863 = vadd.f32 0.0, %v862
      %864 = vdwg.mxu0
      %v866 = vsel %vm464, %v434, 0
      %v869 = vsel %vm464, %v435, 0
      %871 = vmatpush.msra.mxu0 0.0
      %872 = vmatpush.msra.mxu0 0.0
      %873 = vmatpush.msra.mxu0 0.0
      %874 = vmatpush.msra.mxu0 0.0
      %875 = vmatpush.msra.mxu0 0.0
      %876 = vmatpush.msra.mxu0 0.0
      %877 = vmatpush.msra.mxu0 0.0
      %878 = vmatpush.msra.mxu0 0.0
      %879 = vmatpush.msra.mxu0 0.0
      %880 = vmatpush.msra.mxu0 0.0
      %881 = vmatpush.msra.mxu0 0.0
      %882 = vmatpush.msra.mxu0 0.0
      %883 = vmatpush.msra.mxu0 0.0
      %884 = vmatpush.msra.mxu0 0.0
      %885 = vmatpush.msra.mxu0 %v798
      %886 = vmatpush.msra.mxu0 %v795
      %887 = vmatmul.f32.gmra.mxu0 %v866
      %v888 = vpop.f32.mrf.mxu0
      %v889 = vadd.f32 0.0, %v888
      %890 = vmatmul.f32.gmra.mxu0 %v869
      %v891 = vpop.f32.mrf.mxu0
      %v892 = vadd.f32 0.0, %v891
      %893 = vdwg.mxu0
      %v895 = vsel %vm464, %v436, 0
      %v898 = vsel %vm464, %v437, 0
      %900 = vmatpush.msra.mxu0 0.0
      %901 = vmatpush.msra.mxu0 0.0
      %902 = vmatpush.msra.mxu0 0.0
      %903 = vmatpush.msra.mxu0 0.0
      %904 = vmatpush.msra.mxu0 0.0
      %905 = vmatpush.msra.mxu0 0.0
      %906 = vmatpush.msra.mxu0 0.0
      %907 = vmatpush.msra.mxu0 0.0
      %908 = vmatpush.msra.mxu0 0.0
      %909 = vmatpush.msra.mxu0 0.0
      %910 = vmatpush.msra.mxu0 0.0
      %911 = vmatpush.msra.mxu0 0.0
      %912 = vmatpush.msra.mxu0 0.0
      %913 = vmatpush.msra.mxu0 0.0
      %914 = vmatpush.msra.mxu0 %v804
      %915 = vmatpush.msra.mxu0 %v801
      %916 = vmatmul.f32.gmra.mxu0 %v895
      %v917 = vpop.f32.mrf.mxu0
      %v918 = vadd.f32 0.0, %v917
      %919 = vmatmul.f32.gmra.mxu0 %v898
      %v920 = vpop.f32.mrf.mxu0
      %v921 = vadd.f32 0.0, %v920
      %922 = vdwg.mxu0
      %v924 = vsel %vm464, %v438, 0
      %v927 = vsel %vm464, %v439, 0
      %929 = vmatpush.msra.mxu0 0.0
      %930 = vmatpush.msra.mxu0 0.0
      %931 = vmatpush.msra.mxu0 0.0
      %932 = vmatpush.msra.mxu0 0.0
      %933 = vmatpush.msra.mxu0 0.0
      %934 = vmatpush.msra.mxu0 0.0
      %935 = vmatpush.msra.mxu0 0.0
      %936 = vmatpush.msra.mxu0 0.0
      %937 = vmatpush.msra.mxu0 0.0
      %938 = vmatpush.msra.mxu0 0.0
      %939 = vmatpush.msra.mxu0 0.0
      %940 = vmatpush.msra.mxu0 0.0
      %941 = vmatpush.msra.mxu0 0.0
      %942 = vmatpush.msra.mxu0 0.0
      %943 = vmatpush.msra.mxu0 %v810
      %944 = vmatpush.msra.mxu0 %v807
      %945 = vmatmul.f32.gmra.mxu0 %v924
      %v946 = vpop.f32.mrf.mxu0
      %v947 = vadd.f32 0.0, %v946
      %948 = vmatmul.f32.gmra.mxu0 %v927
      %v949 = vpop.f32.mrf.mxu0
      %v950 = vadd.f32 0.0, %v949
      %951 = vdwg.mxu0
      %v953 = vsel %vm464, %v440, 0
      %v956 = vsel %vm464, %v441, 0
      %958 = vmatpush.msra.mxu0 0.0
      %959 = vmatpush.msra.mxu0 0.0
      %960 = vmatpush.msra.mxu0 0.0
      %961 = vmatpush.msra.mxu0 0.0
      %962 = vmatpush.msra.mxu0 0.0
      %963 = vmatpush.msra.mxu0 0.0
      %964 = vmatpush.msra.mxu0 0.0
      %965 = vmatpush.msra.mxu0 0.0
      %966 = vmatpush.msra.mxu0 0.0
      %967 = vmatpush.msra.mxu0 0.0
      %968 = vmatpush.msra.mxu0 0.0
      %969 = vmatpush.msra.mxu0 0.0
      %970 = vmatpush.msra.mxu0 0.0
      %971 = vmatpush.msra.mxu0 0.0
      %972 = vmatpush.msra.mxu0 %v816
      %973 = vmatpush.msra.mxu0 %v813
      %974 = vmatmul.f32.gmra.mxu0 %v953
      %v975 = vpop.f32.mrf.mxu0
      %v976 = vadd.f32 0.0, %v975
      %977 = vmatmul.f32.gmra.mxu0 %v956
      %v978 = vpop.f32.mrf.mxu0
      %v979 = vadd.f32 0.0, %v978
      %980 = vdwg.mxu0
      %v982 = vsel %vm464, %v442, 0
      %v985 = vsel %vm464, %v443, 0
      %987 = vmatpush.msra.mxu0 0.0
      %988 = vmatpush.msra.mxu0 0.0
      %989 = vmatpush.msra.mxu0 0.0
      %990 = vmatpush.msra.mxu0 0.0
      %991 = vmatpush.msra.mxu0 0.0
      %992 = vmatpush.msra.mxu0 0.0
      %993 = vmatpush.msra.mxu0 0.0
      %994 = vmatpush.msra.mxu0 0.0
      %995 = vmatpush.msra.mxu0 0.0
      %996 = vmatpush.msra.mxu0 0.0
      %997 = vmatpush.msra.mxu0 0.0
      %998 = vmatpush.msra.mxu0 0.0
      %999 = vmatpush.msra.mxu0 0.0
      %1000 = vmatpush.msra.mxu0 0.0
      %1001 = vmatpush.msra.mxu0 %v822
      %1002 = vmatpush.msra.mxu0 %v819
      %1003 = vmatmul.f32.gmra.mxu0 %v982
      %v1004 = vpop.f32.mrf.mxu0
      %v1005 = vadd.f32 0.0, %v1004
      %1006 = vmatmul.f32.gmra.mxu0 %v985
      %v1007 = vpop.f32.mrf.mxu0
      %v1008 = vadd.f32 0.0, %v1007
      %1009 = vdwg.mxu0
      %v1011 = vsel %vm464, %v444, 0
      %v1014 = vsel %vm464, %v445, 0
      %1016 = vmatpush.msra.mxu0 0.0
      %1017 = vmatpush.msra.mxu0 0.0
      %1018 = vmatpush.msra.mxu0 0.0
      %1019 = vmatpush.msra.mxu0 0.0
      %1020 = vmatpush.msra.mxu0 0.0
      %1021 = vmatpush.msra.mxu0 0.0
      %1022 = vmatpush.msra.mxu0 0.0
      %1023 = vmatpush.msra.mxu0 0.0
      %1024 = vmatpush.msra.mxu0 0.0
      %1025 = vmatpush.msra.mxu0 0.0
      %1026 = vmatpush.msra.mxu0 0.0
      %1027 = vmatpush.msra.mxu0 0.0
      %1028 = vmatpush.msra.mxu0 0.0
      %1029 = vmatpush.msra.mxu0 0.0
      %1030 = vmatpush.msra.mxu0 %v828
      %1031 = vmatpush.msra.mxu0 %v825
      %1032 = vmatmul.f32.gmra.mxu0 %v1011
      %v1033 = vpop.f32.mrf.mxu0
      %v1034 = vadd.f32 0.0, %v1033
      %1035 = vmatmul.f32.gmra.mxu0 %v1014
      %v1036 = vpop.f32.mrf.mxu0
      %v1037 = vadd.f32 0.0, %v1036
      %1038 = vdwg.mxu0
      %v1040 = vsel %vm464, %v446, 0
      %v1043 = vsel %vm464, %v447, 0
      %1045 = vmatpush.msra.mxu0 0.0
      %1046 = vmatpush.msra.mxu0 0.0
      %1047 = vmatpush.msra.mxu0 0.0
      %1048 = vmatpush.msra.mxu0 0.0
      %1049 = vmatpush.msra.mxu0 0.0
      %1050 = vmatpush.msra.mxu0 0.0
      %1051 = vmatpush.msra.mxu0 0.0
      %1052 = vmatpush.msra.mxu0 0.0
      %1053 = vmatpush.msra.mxu0 0.0
      %1054 = vmatpush.msra.mxu0 0.0
      %1055 = vmatpush.msra.mxu0 0.0
      %1056 = vmatpush.msra.mxu0 0.0
      %1057 = vmatpush.msra.mxu0 0.0
      %1058 = vmatpush.msra.mxu0 0.0
      %1059 = vmatpush.msra.mxu0 %v834
      %1060 = vmatpush.msra.mxu0 %v831
      %1061 = vmatmul.f32.gmra.mxu0 %v1040
      %v1062 = vpop.f32.mrf.mxu0
      %v1063 = vadd.f32 0.0, %v1062
      %1064 = vmatmul.f32.gmra.mxu0 %v1043
      %v1065 = vpop.f32.mrf.mxu0
      %v1066 = vadd.f32 0.0, %v1065
      %1067 = vdwg.mxu0
      %v1068 = vmul.f32 %v860, %v689
      %v1069 = vmul.f32 %v863, %v690
      %v1070 = vmul.f32 %v889, %v691
      %v1071 = vmul.f32 %v892, %v692
      %v1072 = vmul.f32 %v918, %v693
      %v1073 = vmul.f32 %v921, %v694
      %v1074 = vmul.f32 %v947, %v695
      %v1075 = vmul.f32 %v950, %v696
      %v1076 = vmul.f32 %v976, %v697
      %v1077 = vmul.f32 %v979, %v698
      %v1078 = vmul.f32 %v1005, %v699
      %v1079 = vmul.f32 %v1008, %v700
      %v1080 = vmul.f32 %v1034, %v701
      %v1081 = vmul.f32 %v1037, %v702
      %v1082 = vmul.f32 %v1063, %v703
      %v1083 = vmul.f32 %v1066, %v704
      %v1084 = vld [vmem:[%s4] sm:$0x1]
      %v1086 = vperm.slane %v1084, 0
      %v1088 = vadd.f32 %v1068, %v1086
      %v1089 = vadd.f32 %v1069, %v1086
      %v1090 = vadd.f32 %v1070, %v1086
      %v1091 = vadd.f32 %v1071, %v1086
      %v1092 = vadd.f32 %v1072, %v1086
      %v1093 = vadd.f32 %v1073, %v1086
      %v1094 = vadd.f32 %v1074, %v1086
      %v1095 = vadd.f32 %v1075, %v1086
      %v1096 = vadd.f32 %v1076, %v1086
      %v1097 = vadd.f32 %v1077, %v1086
      %v1098 = vadd.f32 %v1078, %v1086
      %v1099 = vadd.f32 %v1079, %v1086
      %v1100 = vadd.f32 %v1080, %v1086
      %v1101 = vadd.f32 %v1081, %v1086
      %v1102 = vadd.f32 %v1082, %v1086
      %v1103 = vadd.f32 %v1083, %v1086
      %v1104 = vmax.f32 %v1088, 0.0
      %v1105 = vmax.f32 %v1089, 0.0
      %v1106 = vmax.f32 %v1090, 0.0
      %v1107 = vmax.f32 %v1091, 0.0
      %v1108 = vmax.f32 %v1092, 0.0
      %v1109 = vmax.f32 %v1093, 0.0
      %v1110 = vmax.f32 %v1094, 0.0
      %v1111 = vmax.f32 %v1095, 0.0
      %v1112 = vmax.f32 %v1096, 0.0
      %v1113 = vmax.f32 %v1097, 0.0
      %v1114 = vmax.f32 %v1098, 0.0
      %v1115 = vmax.f32 %v1099, 0.0
      %v1116 = vmax.f32 %v1100, 0.0
      %v1117 = vmax.f32 %v1101, 0.0
      %v1118 = vmax.f32 %v1102, 0.0
      %v1119 = vmax.f32 %v1103, 0.0
      %v1120 = vld [vmem:[%s413] sm:$0xff]
      %v1121 = vrot.slane %v1120, 1
      %v1122 = vrot.slane %v1120, 2
      %v1123 = vrot.slane %v1120, 3
      %v1124 = vrot.slane %v1120, 4
      %v1125 = vrot.slane %v1120, 5
      %v1126 = vrot.slane %v1120, 6
      %v1127 = vrot.slane %v1120, 7
      %v1128 = vlaneseq
      %v1129 = vshrl.u32 %v1128, 7
      %v1130 = vadd.s32 %v1129, 8
      %v1131 = vperm.slane %v1120, 0
      %v1132 = vperm.slane %v1121, 0
      %v1133 = vperm.slane %v1122, 0
      %v1134 = vperm.slane %v1123, 0
      %v1135 = vperm.slane %v1124, 0
      %v1136 = vperm.slane %v1125, 0
      %v1137 = vperm.slane %v1126, 0
      %v1138 = vperm.slane %v1127, 0
      %vm1139 = vcmp.lt.s32.totalorder %v1129, %v1131
      %vm1140 = vcmp.lt.s32.totalorder %v1130, %v1131
      %vm1141 = vcmp.lt.s32.totalorder %v1129, %v1132
      %vm1142 = vcmp.lt.s32.totalorder %v1130, %v1132
      %vm1143 = vcmp.lt.s32.totalorder %v1129, %v1133
      %vm1144 = vcmp.lt.s32.totalorder %v1130, %v1133
      %vm1145 = vcmp.lt.s32.totalorder %v1129, %v1134
      %vm1146 = vcmp.lt.s32.totalorder %v1130, %v1134
      %vm1147 = vcmp.lt.s32.totalorder %v1129, %v1135
      %vm1148 = vcmp.lt.s32.totalorder %v1130, %v1135
      %vm1149 = vcmp.lt.s32.totalorder %v1129, %v1136
      %vm1150 = vcmp.lt.s32.totalorder %v1130, %v1136
      %vm1151 = vcmp.lt.s32.totalorder %v1129, %v1137
      %vm1152 = vcmp.lt.s32.totalorder %v1130, %v1137
      %vm1153 = vcmp.lt.s32.totalorder %v1129, %v1138
      %vm1154 = vcmp.lt.s32.totalorder %v1130, %v1138
      %v1155 = vsel %vm1139, 1, 0
      %v1156 = vsel %vm1140, 1, 0
      %v1157 = vsel %vm1141, 1, 0
      %v1158 = vsel %vm1142, 1, 0
      %v1159 = vsel %vm1143, 1, 0
      %v1160 = vsel %vm1144, 1, 0
      %v1161 = vsel %vm1145, 1, 0
      %v1162 = vsel %vm1146, 1, 0
      %v1163 = vsel %vm1147, 1, 0
      %v1164 = vsel %vm1148, 1, 0
      %v1165 = vsel %vm1149, 1, 0
      %v1166 = vsel %vm1150, 1, 0
      %v1167 = vsel %vm1151, 1, 0
      %v1168 = vsel %vm1152, 1, 0
      %v1169 = vsel %vm1153, 1, 0
      %v1170 = vsel %vm1154, 1, 0
      %1171 = vset.pattern.permute.xlu0 0
      %1172 = vperm.xlu0 %1171, %v1155
      %v1173 = vpop.permute.xlu0 %1172
      %1174 = vset.pattern.permute.xlu0 0
      %1175 = vperm.xlu0 %1174, %v1156
      %v1176 = vpop.permute.xlu0 %1175
      %1177 = vset.pattern.permute.xlu0 0
      %1178 = vperm.xlu0 %1177, %v1157
      %v1179 = vpop.permute.xlu0 %1178
      %1180 = vset.pattern.permute.xlu0 0
      %1181 = vperm.xlu0 %1180, %v1158
      %v1182 = vpop.permute.xlu0 %1181
      %1183 = vset.pattern.permute.xlu0 0
      %1184 = vperm.xlu0 %1183, %v1159
      %v1185 = vpop.permute.xlu0 %1184
      %1186 = vset.pattern.permute.xlu0 0
      %1187 = vperm.xlu0 %1186, %v1160
      %v1188 = vpop.permute.xlu0 %1187
      %1189 = vset.pattern.permute.xlu0 0
      %1190 = vperm.xlu0 %1189, %v1161
      %v1191 = vpop.permute.xlu0 %1190
      %1192 = vset.pattern.permute.xlu0 0
      %1193 = vperm.xlu0 %1192, %v1162
      %v1194 = vpop.permute.xlu0 %1193
      %1195 = vset.pattern.permute.xlu0 0
      %1196 = vperm.xlu0 %1195, %v1163
      %v1197 = vpop.permute.xlu0 %1196
      %1198 = vset.pattern.permute.xlu0 0
      %1199 = vperm.xlu0 %1198, %v1164
      %v1200 = vpop.permute.xlu0 %1199
      %1201 = vset.pattern.permute.xlu0 0
      %1202 = vperm.xlu0 %1201, %v1165
      %v1203 = vpop.permute.xlu0 %1202
      %1204 = vset.pattern.permute.xlu0 0
      %1205 = vperm.xlu0 %1204, %v1166
      %v1206 = vpop.permute.xlu0 %1205
      %1207 = vset.pattern.permute.xlu0 0
      %1208 = vperm.xlu0 %1207, %v1167
      %v1209 = vpop.permute.xlu0 %1208
      %1210 = vset.pattern.permute.xlu0 0
      %1211 = vperm.xlu0 %1210, %v1168
      %v1212 = vpop.permute.xlu0 %1211
      %1213 = vset.pattern.permute.xlu0 0
      %1214 = vperm.xlu0 %1213, %v1169
      %v1215 = vpop.permute.xlu0 %1214
      %1216 = vset.pattern.permute.xlu0 0
      %1217 = vperm.xlu0 %1216, %v1170
      %v1218 = vpop.permute.xlu0 %1217
      %vm1219 = vcmp.eq.s32.totalorder %v1173, 1
      %vm1220 = vcmp.eq.s32.totalorder %v1176, 1
      %vm1221 = vcmp.eq.s32.totalorder %v1179, 1
      %vm1222 = vcmp.eq.s32.totalorder %v1182, 1
      %vm1223 = vcmp.eq.s32.totalorder %v1185, 1
      %vm1224 = vcmp.eq.s32.totalorder %v1188, 1
      %vm1225 = vcmp.eq.s32.totalorder %v1191, 1
      %vm1226 = vcmp.eq.s32.totalorder %v1194, 1
      %vm1227 = vcmp.eq.s32.totalorder %v1197, 1
      %vm1228 = vcmp.eq.s32.totalorder %v1200, 1
      %vm1229 = vcmp.eq.s32.totalorder %v1203, 1
      %vm1230 = vcmp.eq.s32.totalorder %v1206, 1
      %vm1231 = vcmp.eq.s32.totalorder %v1209, 1
      %vm1232 = vcmp.eq.s32.totalorder %v1212, 1
      %vm1233 = vcmp.eq.s32.totalorder %v1215, 1
      %vm1234 = vcmp.eq.s32.totalorder %v1218, 1
      %v1235 = vsel %vm1219, %v1104, 0.0
      %v1236 = vsel %vm1220, %v1105, 0.0
      %v1237 = vsel %vm1221, %v1106, 0.0
      %v1238 = vsel %vm1222, %v1107, 0.0
      %v1239 = vsel %vm1223, %v1108, 0.0
      %v1240 = vsel %vm1224, %v1109, 0.0
      %v1241 = vsel %vm1225, %v1110, 0.0
      %v1242 = vsel %vm1226, %v1111, 0.0
      %v1243 = vsel %vm1227, %v1112, 0.0
      %v1244 = vsel %vm1228, %v1113, 0.0
      %v1245 = vsel %vm1229, %v1114, 0.0
      %v1246 = vsel %vm1230, %v1115, 0.0
      %v1247 = vsel %vm1231, %v1116, 0.0
      %v1248 = vsel %vm1232, %v1117, 0.0
      %v1249 = vsel %vm1233, %v1118, 0.0
      %v1250 = vsel %vm1234, %v1119, 0.0
      %vm1251 = vcmask 261120
      %v1252 = vsel %vm1251, %v1235, -inf
      %v1253 = vsel %vm1251, %v1236, -inf
      %v1254 = vmax.f32 %v1252, %v1253
      %v1255 = vrot.slane %v1254, 4
      %v1256 = vmax.f32 %v1254, %v1255
      %v1257 = vrot.slane %v1256, 2
      %v1258 = vmax.f32 %v1256, %v1257
      %v1259 = vrot.slane %v1258, 1
      %v1260 = vmax.f32 %v1258, %v1259
      %v1261 = vsel %vm1251, %v1237, -inf
      %v1262 = vsel %vm1251, %v1238, -inf
      %v1263 = vmax.f32 %v1261, %v1262
      %v1264 = vrot.slane %v1263, 4
      %v1265 = vmax.f32 %v1263, %v1264
      %v1266 = vrot.slane %v1265, 2
      %v1267 = vmax.f32 %v1265, %v1266
      %v1268 = vrot.slane %v1267, 1
      %v1269 = vmax.f32 %v1267, %v1268
      %v1270 = vsel %vm1251, %v1239, -inf
      %v1271 = vsel %vm1251, %v1240, -inf
      %v1272 = vmax.f32 %v1270, %v1271
      %v1273 = vrot.slane %v1272, 4
      %v1274 = vmax.f32 %v1272, %v1273
      %v1275 = vrot.slane %v1274, 2
      %v1276 = vmax.f32 %v1274, %v1275
      %v1277 = vrot.slane %v1276, 1
      %v1278 = vmax.f32 %v1276, %v1277
      %v1279 = vsel %vm1251, %v1241, -inf
      %v1280 = vsel %vm1251, %v1242, -inf
      %v1281 = vmax.f32 %v1279, %v1280
      %v1282 = vrot.slane %v1281, 4
      %v1283 = vmax.f32 %v1281, %v1282
      %v1284 = vrot.slane %v1283, 2
      %v1285 = vmax.f32 %v1283, %v1284
      %v1286 = vrot.slane %v1285, 1
      %v1287 = vmax.f32 %v1285, %v1286
      %v1288 = vsel %vm1251, %v1243, -inf
      %v1289 = vsel %vm1251, %v1244, -inf
      %v1290 = vmax.f32 %v1288, %v1289
      %v1291 = vrot.slane %v1290, 4
      %v1292 = vmax.f32 %v1290, %v1291
      %v1293 = vrot.slane %v1292, 2
      %v1294 = vmax.f32 %v1292, %v1293
      %v1295 = vrot.slane %v1294, 1
      %v1296 = vmax.f32 %v1294, %v1295
      %v1297 = vsel %vm1251, %v1245, -inf
      %v1298 = vsel %vm1251, %v1246, -inf
      %v1299 = vmax.f32 %v1297, %v1298
      %v1300 = vrot.slane %v1299, 4
      %v1301 = vmax.f32 %v1299, %v1300
      %v1302 = vrot.slane %v1301, 2
      %v1303 = vmax.f32 %v1301, %v1302
      %v1304 = vrot.slane %v1303, 1
      %v1305 = vmax.f32 %v1303, %v1304
      %v1306 = vsel %vm1251, %v1247, -inf
      %v1307 = vsel %vm1251, %v1248, -inf
      %v1308 = vmax.f32 %v1306, %v1307
      %v1309 = vrot.slane %v1308, 4
      %v1310 = vmax.f32 %v1308, %v1309
      %v1311 = vrot.slane %v1310, 2
      %v1312 = vmax.f32 %v1310, %v1311
      %v1313 = vrot.slane %v1312, 1
      %v1314 = vmax.f32 %v1312, %v1313
      %v1315 = vsel %vm1251, %v1249, -inf
      %v1316 = vsel %vm1251, %v1250, -inf
      %v1317 = vmax.f32 %v1315, %v1316
      %v1318 = vrot.slane %v1317, 4
      %v1319 = vmax.f32 %v1317, %v1318
      %v1320 = vrot.slane %v1319, 2
      %v1321 = vmax.f32 %v1319, %v1320
      %v1322 = vrot.slane %v1321, 1
      %v1323 = vmax.f32 %v1321, %v1322
      %v1324 = vld [vmem:[%s5] sm:$0xff]
      %v1325 = vld [vmem:[%s5 + $0x8] sm:$0xff]
      %v1326 = vld [vmem:[%s5 + $0x10] sm:$0xff]
      %v1327 = vld [vmem:[%s5 + $0x18] sm:$0xff]
      %v1328 = vld [vmem:[%s6] sm:$0x1]
      %v1330 = vperm.slane %v1328, 0
      %vm1340 = vcmask 1041409
      %v1341 = vsel %vm1340, %v1269, %v1260
      %vm1342 = vcmask 1042434
      %v1343 = vsel %vm1342, %v1278, %v1341
      %vm1344 = vcmask 1043459
      %v1345 = vsel %vm1344, %v1287, %v1343
      %vm1346 = vcmask 1044484
      %v1347 = vsel %vm1346, %v1296, %v1345
      %vm1348 = vcmask 1045509
      %v1349 = vsel %vm1348, %v1305, %v1347
      %vm1350 = vcmask 1046534
      %v1351 = vsel %vm1350, %v1314, %v1349
      %vm1352 = vcmask 1047559
      %v1353 = vsel %vm1352, %v1323, %v1351
      %v1354 = vsel %vm1251, %v1353, 0
      %1356 = vmatpush.msra.mxu0 0.0
      %1357 = vmatpush.msra.mxu0 0.0
      %1358 = vmatpush.msra.mxu0 0.0
      %1359 = vmatpush.msra.mxu0 0.0
      %1360 = vmatpush.msra.mxu0 0.0
      %1361 = vmatpush.msra.mxu0 0.0
      %1362 = vmatpush.msra.mxu0 0.0
      %1363 = vmatpush.msra.mxu0 0.0
      %1364 = vmatpush.msra.mxu0 0.0
      %1365 = vmatpush.msra.mxu0 0.0
      %1366 = vmatpush.msra.mxu0 0.0
      %1367 = vmatpush.msra.mxu0 0.0
      %1368 = vmatpush.msra.mxu0 %v1327
      %1369 = vmatpush.msra.mxu0 %v1326
      %1370 = vmatpush.msra.mxu0 %v1325
      %1371 = vmatpush.msra.mxu0 %v1324
      %1372 = vmatmul.f32.gmra.mxu0 %v1354
      %v1373 = vpop.f32.mrf.mxu0
      %v1374 = vadd.f32 %v1330, %v1373
      %1375 = vdwg.mxu0
      %v1376 = vmax.f32 %v1374, 0.0
      %v1377 = vld [vmem:[%s7] sm:$0xff]
      %v1378 = vld [vmem:[%s7 + $0x8] sm:$0xff]
      %v1379 = vld [vmem:[%s7 + $0x10] sm:$0xff]
      %v1380 = vld [vmem:[%s7 + $0x18] sm:$0xff]
      %v1381 = vld [vmem:[%s8] sm:$0x1]
      %v1383 = vperm.slane %v1381, 0
      %v1386 = vsel %vm1251, %v1376, 0
      %1388 = vmatpush.msra.mxu0 0.0
      %1389 = vmatpush.msra.mxu0 0.0
      %1390 = vmatpush.msra.mxu0 0.0
      %1391 = vmatpush.msra.mxu0 0.0
      %1392 = vmatpush.msra.mxu0 0.0
      %1393 = vmatpush.msra.mxu0 0.0
      %1394 = vmatpush.msra.mxu0 0.0
      %1395 = vmatpush.msra.mxu0 0.0
      %1396 = vmatpush.msra.mxu0 0.0
      %1397 = vmatpush.msra.mxu0 0.0
      %1398 = vmatpush.msra.mxu0 0.0
      %1399 = vmatpush.msra.mxu0 0.0
      %1400 = vmatpush.msra.mxu0 %v1380
      %1401 = vmatpush.msra.mxu0 %v1379
      %1402 = vmatpush.msra.mxu0 %v1378
      %1403 = vmatpush.msra.mxu0 %v1377
      %1404 = vmatmul.f32.gmra.mxu0 %v1386
      %v1405 = vpop.f32.mrf.mxu0
      %v1406 = vadd.f32 %v1383, %v1405
      %1407 = vdwg.mxu0
      %v1408 = vmax.f32 %v1406, 0.0
      %v1409 = vld [vmem:[%s9] sm:$0xff]
      %v1410 = vld [vmem:[%s9 + $0x8] sm:$0xff]
      %v1411 = vld [vmem:[%s10] sm:$0x1]
      %v1413 = vperm.slane %v1411, 0
      %v1416 = vsel %vm464, %v1408, 0
      %1418 = vmatpush.msra.mxu0 0.0
      %1419 = vmatpush.msra.mxu0 0.0
      %1420 = vmatpush.msra.mxu0 0.0
      %1421 = vmatpush.msra.mxu0 0.0
      %1422 = vmatpush.msra.mxu0 0.0
      %1423 = vmatpush.msra.mxu0 0.0
      %1424 = vmatpush.msra.mxu0 0.0
      %1425 = vmatpush.msra.mxu0 0.0
      %1426 = vmatpush.msra.mxu0 0.0
      %1427 = vmatpush.msra.mxu0 0.0
      %1428 = vmatpush.msra.mxu0 0.0
      %1429 = vmatpush.msra.mxu0 0.0
      %1430 = vmatpush.msra.mxu0 0.0
      %1431 = vmatpush.msra.mxu0 0.0
      %1432 = vmatpush.msra.mxu0 %v1410
      %1433 = vmatpush.msra.mxu0 %v1409
      %1434 = vmatmul.f32.gmra.mxu0 %v1416
      %v1435 = vpop.f32.mrf.mxu0
      %v1436 = vadd.f32 %v1413, %v1435
      %1437 = vdwg.mxu0
      %vm1438 = vcmask 31744
      %1439 = vst.msk [vmem:[%s431] sm:$0xff] %vm1438, %v1436
      %p1440 = scmp.lt.s32.totalorder %s22, 1
      %s1441 = scalar_select %p1440, %s22, 1
      %s1442 = smul.addr %s1441, 8
      %s1443 = scalar_lea.vmem %s11, %s1442
      // Predicated region
      $region65: #{tpu_custom_call.1} parent=63 // pred_check
        %p1444 = pneg %p286
      $region66: #{tpu_custom_call.1} parent=63 // pred_check_branch
        %1446 = sbr.rel (%p1444) target = $region68
      $region67: #{tpu_custom_call.1} parent=63 // pred_region
        _
      $region68: #{tpu_custom_call.1} parent=63 // pred_fallthru
        _
    $region64: #{tpu_custom_call.1} parent=5 // pred_fallthru
      _
    %p1447 = scmp.le.s32.totalorder 2, %s17
    // Predicated region
    $region69: #{tpu_custom_call.1} parent=5 // pred_check
      %p1448 = pneg %p1447
    $region70: #{tpu_custom_call.1} parent=5 // pred_check_branch
      %1450 = sbr.rel (%p1448) target = $region72
    $region71: #{tpu_custom_call.1} parent=5 // pred_region
      %s1451 = ssub.s32 %s17, 2
      // Predicated region
      $region73: #{tpu_custom_call.1} parent=71 // pred_check
        %p1452 = pneg %p292
      $region74: #{tpu_custom_call.1} parent=71 // pred_check_branch
        %1454 = sbr.rel (%p1452) target = $region76
      $region75: #{tpu_custom_call.1} parent=71 // pred_region
        %p1455 = scmp.lt.s32.totalorder %s23, 1
        %s1456 = scalar_select %p1455, %s23, 1
        %s1457 = smul.addr %s1456, 8
        %s1458 = scalar_lea.vmem %s11, %s1457
      $region76: #{tpu_custom_call.1} parent=71 // pred_fallthru
        _
    $region72: #{tpu_custom_call.1} parent=5 // pred_fallthru
      _
  $region6: #{tpu_custom_call.1} parent=0 // loop_footer
    %s21 = sadd.s32 1, %s17
  $region7: #{tpu_custom_call.1} parent=0 // loop_footer_branch
    %16 = sbr.rel target = $region3
  $region8: #{tpu_custom_call.1} parent=0 // loop_exit
    _

</llo_original>
